<compile_context>
chip_gen: v5e
topology: v5e:2x2
jax: 0.10.0
libtpu: 0.0.40
codegen_flags: <defaults>
</compile_context>

<pallas_src>
import jax
import jax.numpy as jnp
from jax import lax
from jax.experimental import pallas as pl
from jax.experimental.pallas import tpu as pltpu


def _encoder_lstm_kernel(x_ref, wih0_ref, wihr_ref, whh_ref, b_ref,
                         out_ref, hn_ref, cn_ref, gates_sc):
    """Fused multi-layer LSTM over the whole (padded) sequence.

    x_ref    : (T*Bp, E)   flattened time-major embedded inputs
    wih0_ref : (E, 4H)     layer-0 input weights (transposed)
    wihr_ref : (L, H, 4H)  input weights for layers 1..L-1 (slot 0 unused)
    whh_ref  : (L, H, 4H)  recurrent weights (transposed)
    b_ref    : (L, 1, 4H)  combined biases b_ih + b_hh
    out_ref  : (T*Bp, H)   last-layer hidden sequence (also reused as the
                           VMEM-resident inter-layer activation buffer)
    hn_ref   : (L, Bp, H)  final h per layer
    cn_ref   : (L, Bp, H)  final c per layer
    gates_sc : (T*Bp, 4H)  VMEM scratch for precomputed gate inputs
    """
    TB, H = out_ref.shape
    G = gates_sc.shape[-1]            # 4H
    L, Bp, _ = hn_ref.shape
    T = TB // Bp

    # Lane mask selecting the tanh ("g") gate region of the fused (Bp, 4H)
    # tile; hoisted out of all loops.
    lane = lax.broadcasted_iota(jnp.int32, (Bp, G), 1)
    g_mask = (lane >= 2 * H) & (lane < 3 * H)

    for l in range(L):                # static unroll over layers
        # ---- phase 1: batched input projection for the whole sequence ----
        if l == 0:
            xg = jnp.dot(x_ref[...], wih0_ref[...],
                         preferred_element_type=jnp.float32)
        else:
            # previous layer's sequence is resident in out_ref (VMEM)
            xg = jnp.dot(out_ref[...], wihr_ref[l],
                         preferred_element_type=jnp.float32)
        gates_sc[...] = xg + b_ref[l]

        # ---- phase 2: serial recurrence over T; only h @ W_hh per step ----
        whh = whh_ref[l]              # (H, 4H), loop-invariant

        def step(t, carry, whh=whh):
            h, c = carry
            row = pl.multiple_of(t * Bp, Bp)
            g = gates_sc[pl.ds(row, Bp), :] + jnp.dot(
                h, whh, preferred_element_type=jnp.float32)
            # Full-lane-width EUP passes + one select, then static slices.
            act = jnp.where(g_mask, jnp.tanh(g), jax.nn.sigmoid(g))
            i_g = act[:, 0 * H:1 * H]
            f_g = act[:, 1 * H:2 * H]
            g_g = act[:, 2 * H:3 * H]
            o_g = act[:, 3 * H:4 * H]
            c_new = f_g * c + i_g * g_g
            h_new = o_g * jnp.tanh(c_new)
            out_ref[pl.ds(row, Bp), :] = h_new
            return (h_new, c_new)

        init = (jnp.zeros((Bp, H), jnp.float32),
                jnp.zeros((Bp, H), jnp.float32))
        h_fin, c_fin = lax.fori_loop(0, T, step, init, unroll=True)

        hn_ref[l] = h_fin
        cn_ref[l] = c_fin


def encoder_lstm_pallas(x_tbe, layers):
    """x_tbe: (T, B, E) f32 embedded inputs (time-major).
    layers: list of (w_ih (4H,in), w_hh (4H,H), b_ih (4H,), b_hh (4H,)).
    Returns (out (T,B,H), h_n (L,B,H), c_n (L,B,H))."""
    T, B, E = x_tbe.shape
    L = len(layers)
    H = layers[0][1].shape[1]
    G = 4 * H

    # Pad batch to the f32 sublane count (8).
    Bp = -(-B // 8) * 8
    if Bp != B:
        x_tbe = jnp.pad(x_tbe, ((0, 0), (0, Bp - B), (0, 0)))
    x_flat = x_tbe.reshape(T * Bp, E)

    wih0_t = jnp.transpose(layers[0][0])                       # (E, 4H)
    wihr = jnp.stack(
        [jnp.zeros((H, G), jnp.float32)]
        + [jnp.transpose(layers[l][0]) for l in range(1, L)], axis=0)  # (L,H,4H)
    whh = jnp.stack([jnp.transpose(layers[l][1]) for l in range(L)],
                    axis=0)                                    # (L, H, 4H)
    bias = jnp.stack([(layers[l][2] + layers[l][3]).reshape(1, G)
                      for l in range(L)], axis=0)              # (L, 1, 4H)

    vmem = pl.BlockSpec(memory_space=pltpu.MemorySpace.VMEM)
    out_flat, h_n, c_n = pl.pallas_call(
        _encoder_lstm_kernel,
        out_shape=(
            jax.ShapeDtypeStruct((T * Bp, H), jnp.float32),
            jax.ShapeDtypeStruct((L, Bp, H), jnp.float32),
            jax.ShapeDtypeStruct((L, Bp, H), jnp.float32),
        ),
        in_specs=[vmem, vmem, vmem, vmem, vmem],
        out_specs=(vmem, vmem, vmem),
        scratch_shapes=[pltpu.VMEM((T * Bp, G), jnp.float32)],
    )(x_flat, wih0_t, wihr, whh, bias)

    out = out_flat.reshape(T, Bp, H)[:, :B, :]                 # (T, B, H)
    return out, h_n[:, :B, :], c_n[:, :B, :]


def init_encoder_params(key, input_dim, emb_dim, hidden_dim, n_layers):
    keys = jax.random.split(key, 1 + 4 * n_layers)
    params = {
        "embedding": jax.random.normal(keys[0], (input_dim, emb_dim), jnp.float32)
    }
    k = 1.0 / float(hidden_dim) ** 0.5           # PyTorch LSTM init range
    layers = []
    for l in range(n_layers):
        in_dim = emb_dim if l == 0 else hidden_dim
        kk = keys[1 + 4 * l: 1 + 4 * (l + 1)]
        w_ih = jax.random.uniform(kk[0], (4 * hidden_dim, in_dim), jnp.float32, -k, k)
        w_hh = jax.random.uniform(kk[1], (4 * hidden_dim, hidden_dim), jnp.float32, -k, k)
        b_ih = jax.random.uniform(kk[2], (4 * hidden_dim,), jnp.float32, -k, k)
        b_hh = jax.random.uniform(kk[3], (4 * hidden_dim,), jnp.float32, -k, k)
        layers.append((w_ih, w_hh, b_ih, b_hh))
    params["layers"] = layers
    return params


def encoder_forward(params, src):
    """src: (B, T) int32 token ids (batch_first, like PyTorch).
    Returns (outputs (B, T, H), (h_n, c_n) each (n_layers, B, H))."""
    embedded = jnp.take(params["embedding"], src, axis=0)   # (B, T, E)  glue
    x = jnp.transpose(embedded, (1, 0, 2))                  # (T, B, E)
    out_tbh, h_n, c_n = encoder_lstm_pallas(x, params["layers"])
    outputs = jnp.transpose(out_tbh, (1, 0, 2))             # (B, T, H)
    return outputs, (h_n, c_n)


# ----- pure-JAX reference (lax.scan) for correctness check -----
def _lstm_layer_ref(x_tbe, w_ih, w_hh, b_ih, b_hh):
    T, B, _ = x_tbe.shape
    H = w_hh.shape[1]

    def step(carry, x_t):
        h, c = carry
        gates = x_t @ w_ih.T + h @ w_hh.T + b_ih + b_hh
        i = jax.nn.sigmoid(gates[:, :H])
        f = jax.nn.sigmoid(gates[:, H:2 * H])
        g = jnp.tanh(gates[:, 2 * H:3 * H])
        o = jax.nn.sigmoid(gates[:, 3 * H:])
        c = f * c + i * g
        h = o * jnp.tanh(c)
        return (h, c), h

    init = (jnp.zeros((B, H), jnp.float32), jnp.zeros((B, H), jnp.float32))
    (h_n, c_n), out = lax.scan(step, init, x_tbe)
    return out, h_n, c_n


def encoder_forward_ref(params, src):
    embedded = jnp.take(params["embedding"], src, axis=0)
    x = jnp.transpose(embedded, (1, 0, 2))
    hs, cs = [], []
    for (w_ih, w_hh, b_ih, b_hh) in params["layers"]:
        x, h_n, c_n = _lstm_layer_ref(x, w_ih, w_hh, b_ih, b_hh)
        hs.append(h_n)
        cs.append(c_n)
    return jnp.transpose(x, (1, 0, 2)), (jnp.stack(hs, 0), jnp.stack(cs, 0))


if __name__ == "__main__":
    INPUT_DIM = 50    # vocab size
    EMB_DIM = 32
    HIDDEN_DIM = 32
    N_LAYERS = 2
    B, T = 2, 8

    key = jax.random.PRNGKey(0)
    pkey, skey = jax.random.split(key)
    params = init_encoder_params(pkey, INPUT_DIM, EMB_DIM, HIDDEN_DIM, N_LAYERS)
    src = jax.random.randint(skey, (B, T), 0, INPUT_DIM, dtype=jnp.int32)

    outputs, (h_n, c_n) = encoder_forward(params, src)
    jax.block_until_ready((outputs, h_n, c_n))

    ref_out, (ref_h, ref_c) = encoder_forward_ref(params, src)
    assert outputs.shape == (B, T, HIDDEN_DIM)
    assert h_n.shape == (N_LAYERS, B, HIDDEN_DIM)
    assert c_n.shape == (N_LAYERS, B, HIDDEN_DIM)
    assert jnp.allclose(outputs, ref_out, atol=2e-5, rtol=1e-5)
    assert jnp.allclose(h_n, ref_h, atol=2e-5, rtol=1e-5)
    assert jnp.allclose(c_n, ref_c, atol=2e-5, rtol=1e-5)

    print("KERNEL_OK")
</pallas_src>

<mosaic_0001>
module attributes {stable_mosaic.version = 11 : i64} {
  func.func @_encoder_lstm_kernel(%arg0: memref<64x32xf32, #tpu.memory_space<vmem>>, %arg1: memref<32x128xf32, #tpu.memory_space<vmem>>, %arg2: memref<2x32x128xf32, #tpu.memory_space<vmem>>, %arg3: memref<2x32x128xf32, #tpu.memory_space<vmem>>, %arg4: memref<2x1x128xf32, #tpu.memory_space<vmem>>, %arg5: memref<64x32xf32, #tpu.memory_space<vmem>>, %arg6: memref<2x8x32xf32, #tpu.memory_space<vmem>>, %arg7: memref<2x8x32xf32, #tpu.memory_space<vmem>>, %arg8: memref<64x128xf32, #tpu.memory_space<vmem>>) attributes {dimension_semantics = [], scalar_prefetch = 0 : i64, scratch_operands = 1 : i64, tpu.core_type = #tpu.core_type<tc>} {
    %0 = tpu.iota {dimensions = array<i32: 1>} : vector<8x128xi32>
    %c64_i32 = arith.constant 64 : i32
    %1 = vector.broadcast %c64_i32 : i32 to vector<8x128xi32>
    %2 = arith.cmpi sge, %0, %1 : vector<8x128xi32>
    %c96_i32 = arith.constant 96 : i32
    %3 = vector.broadcast %c96_i32 : i32 to vector<8x128xi32>
    %4 = arith.cmpi slt, %0, %3 : vector<8x128xi32>
    %5 = arith.andi %2, %4 : vector<8x128xi1>
    %c0 = arith.constant 0 : index
    %c0_0 = arith.constant 0 : index
    %6 = vector.load %arg0[%c0, %c0_0] : memref<64x32xf32, #tpu.memory_space<vmem>>, vector<64x32xf32>
    %c0_1 = arith.constant 0 : index
    %c0_2 = arith.constant 0 : index
    %7 = vector.load %arg1[%c0_1, %c0_2] : memref<32x128xf32, #tpu.memory_space<vmem>>, vector<32x128xf32>
    %cst = arith.constant dense<0.000000e+00> : vector<64x128xf32>
    %8 = tpu.matmul %6, %7, %cst {dimension_numbers = #tpu.dot_dimension_numbers<[1], [0], [0], [1], [0, 0, 1, 1], [], []>} : vector<64x32xf32>, vector<32x128xf32>, vector<64x128xf32> -> vector<64x128xf32>
    %c0_3 = arith.constant 0 : index
    %c0_4 = arith.constant 0 : index
    %c0_5 = arith.constant 0 : index
    %9 = vector.load %arg4[%c0_3, %c0_4, %c0_5] : memref<2x1x128xf32, #tpu.memory_space<vmem>>, vector<1x1x128xf32>
    %10 = vector.shape_cast %9 : vector<1x1x128xf32> to vector<1x128xf32>
    %11 = vector.broadcast %10 : vector<1x128xf32> to vector<64x128xf32>
    %12 = arith.addf %8, %11 : vector<64x128xf32>
    %c0_6 = arith.constant 0 : index
    %c0_7 = arith.constant 0 : index
    %13 = vector.load %arg8[%c0_6, %c0_7] : memref<64x128xf32, #tpu.memory_space<vmem>>, vector<64x128xf32>
    tpu.vector_store %arg8[%c0_6, %c0_7], %12 {strides = array<i32>} : memref<64x128xf32, #tpu.memory_space<vmem>>, vector<64x128xf32>,
    %c0_8 = arith.constant 0 : index
    %c0_9 = arith.constant 0 : index
    %c0_10 = arith.constant 0 : index
    %14 = vector.load %arg3[%c0_8, %c0_9, %c0_10] : memref<2x32x128xf32, #tpu.memory_space<vmem>>, vector<1x32x128xf32>
    %15 = vector.shape_cast %14 : vector<1x32x128xf32> to vector<32x128xf32>
    %cst_11 = arith.constant 0.000000e+00 : f32
    %16 = vector.broadcast %cst_11 : f32 to vector<8x32xf32>
    %cst_12 = arith.constant 0.000000e+00 : f32
    %17 = vector.broadcast %cst_12 : f32 to vector<8x32xf32>
    %c0_i32 = arith.constant 0 : i32
    %c8_i32 = arith.constant 8 : i32
    %18 = arith.muli %c0_i32, %c8_i32 : i32
    %19 = tpu.assume_multiple %18, 8 : i32
    %20 = arith.index_cast %19 : i32 to index
    %c0_13 = arith.constant 0 : index
    %21 = vector.load %arg8[%20, %c0_13] : memref<64x128xf32, #tpu.memory_space<vmem>>, vector<8x128xf32>
    %cst_14 = arith.constant dense<0.000000e+00> : vector<8x128xf32>
    %22 = tpu.matmul %16, %15, %cst_14 {dimension_numbers = #tpu.dot_dimension_numbers<[1], [0], [0], [1], [0, 0, 1, 1], [], []>} : vector<8x32xf32>, vector<32x128xf32>, vector<8x128xf32> -> vector<8x128xf32>
    %23 = arith.addf %21, %22 : vector<8x128xf32>
    %24 = math.tanh %23 : vector<8x128xf32>
    %25 = arith.negf %23 : vector<8x128xf32>
    %26 = math.exp %25 : vector<8x128xf32>
    %cst_15 = arith.constant 1.000000e+00 : f32
    %27 = vector.broadcast %cst_15 : f32 to vector<8x128xf32>
    %28 = arith.addf %27, %26 : vector<8x128xf32>
    %29 = arith.divf %27, %28 : vector<8x128xf32>
    %30 = arith.select %5, %24, %29 : vector<8x128xi1>, vector<8x128xf32>
    %31 = vector.extract_strided_slice %30 {offsets = [0, 0], sizes = [8, 32], strides = [1, 1]} : vector<8x128xf32> to vector<8x32xf32>
    %32 = vector.extract_strided_slice %30 {offsets = [0, 32], sizes = [8, 32], strides = [1, 1]} : vector<8x128xf32> to vector<8x32xf32>
    %33 = vector.extract_strided_slice %30 {offsets = [0, 64], sizes = [8, 32], strides = [1, 1]} : vector<8x128xf32> to vector<8x32xf32>
    %34 = vector.extract_strided_slice %30 {offsets = [0, 96], sizes = [8, 32], strides = [1, 1]} : vector<8x128xf32> to vector<8x32xf32>
    %35 = arith.mulf %32, %17 : vector<8x32xf32>
    %36 = arith.mulf %31, %33 : vector<8x32xf32>
    %37 = arith.addf %35, %36 : vector<8x32xf32>
    %38 = math.tanh %37 : vector<8x32xf32>
    %39 = arith.mulf %34, %38 : vector<8x32xf32>
    %40 = arith.index_cast %19 : i32 to index
    %c0_16 = arith.constant 0 : index
    %41 = vector.load %arg5[%40, %c0_16] : memref<64x32xf32, #tpu.memory_space<vmem>>, vector<8x32xf32>
    tpu.vector_store %arg5[%40, %c0_16], %39 {strides = array<i32>} : memref<64x32xf32, #tpu.memory_space<vmem>>, vector<8x32xf32>,
    %c1_i32 = arith.constant 1 : i32
    %c8_i32_17 = arith.constant 8 : i32
    %42 = arith.muli %c1_i32, %c8_i32_17 : i32
    %43 = tpu.assume_multiple %42, 8 : i32
    %44 = arith.index_cast %43 : i32 to index
    %c0_18 = arith.constant 0 : index
    %45 = vector.load %arg8[%44, %c0_18] : memref<64x128xf32, #tpu.memory_space<vmem>>, vector<8x128xf32>
    %cst_19 = arith.constant dense<0.000000e+00> : vector<8x128xf32>
    %46 = tpu.matmul %39, %15, %cst_19 {dimension_numbers = #tpu.dot_dimension_numbers<[1], [0], [0], [1], [0, 0, 1, 1], [], []>} : vector<8x32xf32>, vector<32x128xf32>, vector<8x128xf32> -> vector<8x128xf32>
    %47 = arith.addf %45, %46 : vector<8x128xf32>
    %48 = math.tanh %47 : vector<8x128xf32>
    %49 = arith.negf %47 : vector<8x128xf32>
    %50 = math.exp %49 : vector<8x128xf32>
    %cst_20 = arith.constant 1.000000e+00 : f32
    %51 = vector.broadcast %cst_20 : f32 to vector<8x128xf32>
    %52 = arith.addf %51, %50 : vector<8x128xf32>
    %53 = arith.divf %51, %52 : vector<8x128xf32>
    %54 = arith.select %5, %48, %53 : vector<8x128xi1>, vector<8x128xf32>
    %55 = vector.extract_strided_slice %54 {offsets = [0, 0], sizes = [8, 32], strides = [1, 1]} : vector<8x128xf32> to vector<8x32xf32>
    %56 = vector.extract_strided_slice %54 {offsets = [0, 32], sizes = [8, 32], strides = [1, 1]} : vector<8x128xf32> to vector<8x32xf32>
    %57 = vector.extract_strided_slice %54 {offsets = [0, 64], sizes = [8, 32], strides = [1, 1]} : vector<8x128xf32> to vector<8x32xf32>
    %58 = vector.extract_strided_slice %54 {offsets = [0, 96], sizes = [8, 32], strides = [1, 1]} : vector<8x128xf32> to vector<8x32xf32>
    %59 = arith.mulf %56, %37 : vector<8x32xf32>
    %60 = arith.mulf %55, %57 : vector<8x32xf32>
    %61 = arith.addf %59, %60 : vector<8x32xf32>
    %62 = math.tanh %61 : vector<8x32xf32>
    %63 = arith.mulf %58, %62 : vector<8x32xf32>
    %64 = arith.index_cast %43 : i32 to index
    %c0_21 = arith.constant 0 : index
    %65 = vector.load %arg5[%64, %c0_21] : memref<64x32xf32, #tpu.memory_space<vmem>>, vector<8x32xf32>
    tpu.vector_store %arg5[%64, %c0_21], %63 {strides = array<i32>} : memref<64x32xf32, #tpu.memory_space<vmem>>, vector<8x32xf32>,
    %c2_i32 = arith.constant 2 : i32
    %c8_i32_22 = arith.constant 8 : i32
    %66 = arith.muli %c2_i32, %c8_i32_22 : i32
    %67 = tpu.assume_multiple %66, 8 : i32
    %68 = arith.index_cast %67 : i32 to index
    %c0_23 = arith.constant 0 : index
    %69 = vector.load %arg8[%68, %c0_23] : memref<64x128xf32, #tpu.memory_space<vmem>>, vector<8x128xf32>
    %cst_24 = arith.constant dense<0.000000e+00> : vector<8x128xf32>
    %70 = tpu.matmul %63, %15, %cst_24 {dimension_numbers = #tpu.dot_dimension_numbers<[1], [0], [0], [1], [0, 0, 1, 1], [], []>} : vector<8x32xf32>, vector<32x128xf32>, vector<8x128xf32> -> vector<8x128xf32>
    %71 = arith.addf %69, %70 : vector<8x128xf32>
    %72 = math.tanh %71 : vector<8x128xf32>
    %73 = arith.negf %71 : vector<8x128xf32>
    %74 = math.exp %73 : vector<8x128xf32>
    %cst_25 = arith.constant 1.000000e+00 : f32
    %75 = vector.broadcast %cst_25 : f32 to vector<8x128xf32>
    %76 = arith.addf %75, %74 : vector<8x128xf32>
    %77 = arith.divf %75, %76 : vector<8x128xf32>
    %78 = arith.select %5, %72, %77 : vector<8x128xi1>, vector<8x128xf32>
    %79 = vector.extract_strided_slice %78 {offsets = [0, 0], sizes = [8, 32], strides = [1, 1]} : vector<8x128xf32> to vector<8x32xf32>
    %80 = vector.extract_strided_slice %78 {offsets = [0, 32], sizes = [8, 32], strides = [1, 1]} : vector<8x128xf32> to vector<8x32xf32>
    %81 = vector.extract_strided_slice %78 {offsets = [0, 64], sizes = [8, 32], strides = [1, 1]} : vector<8x128xf32> to vector<8x32xf32>
    %82 = vector.extract_strided_slice %78 {offsets = [0, 96], sizes = [8, 32], strides = [1, 1]} : vector<8x128xf32> to vector<8x32xf32>
    %83 = arith.mulf %80, %61 : vector<8x32xf32>
    %84 = arith.mulf %79, %81 : vector<8x32xf32>
    %85 = arith.addf %83, %84 : vector<8x32xf32>
    %86 = math.tanh %85 : vector<8x32xf32>
    %87 = arith.mulf %82, %86 : vector<8x32xf32>
    %88 = arith.index_cast %67 : i32 to index
    %c0_26 = arith.constant 0 : index
    %89 = vector.load %arg5[%88, %c0_26] : memref<64x32xf32, #tpu.memory_space<vmem>>, vector<8x32xf32>
    tpu.vector_store %arg5[%88, %c0_26], %87 {strides = array<i32>} : memref<64x32xf32, #tpu.memory_space<vmem>>, vector<8x32xf32>,
    %c3_i32 = arith.constant 3 : i32
    %c8_i32_27 = arith.constant 8 : i32
    %90 = arith.muli %c3_i32, %c8_i32_27 : i32
    %91 = tpu.assume_multiple %90, 8 : i32
    %92 = arith.index_cast %91 : i32 to index
    %c0_28 = arith.constant 0 : index
    %93 = vector.load %arg8[%92, %c0_28] : memref<64x128xf32, #tpu.memory_space<vmem>>, vector<8x128xf32>
    %cst_29 = arith.constant dense<0.000000e+00> : vector<8x128xf32>
    %94 = tpu.matmul %87, %15, %cst_29 {dimension_numbers = #tpu.dot_dimension_numbers<[1], [0], [0], [1], [0, 0, 1, 1], [], []>} : vector<8x32xf32>, vector<32x128xf32>, vector<8x128xf32> -> vector<8x128xf32>
    %95 = arith.addf %93, %94 : vector<8x128xf32>
    %96 = math.tanh %95 : vector<8x128xf32>
    %97 = arith.negf %95 : vector<8x128xf32>
    %98 = math.exp %97 : vector<8x128xf32>
    %cst_30 = arith.constant 1.000000e+00 : f32
    %99 = vector.broadcast %cst_30 : f32 to vector<8x128xf32>
    %100 = arith.addf %99, %98 : vector<8x128xf32>
    %101 = arith.divf %99, %100 : vector<8x128xf32>
    %102 = arith.select %5, %96, %101 : vector<8x128xi1>, vector<8x128xf32>
    %103 = vector.extract_strided_slice %102 {offsets = [0, 0], sizes = [8, 32], strides = [1, 1]} : vector<8x128xf32> to vector<8x32xf32>
    %104 = vector.extract_strided_slice %102 {offsets = [0, 32], sizes = [8, 32], strides = [1, 1]} : vector<8x128xf32> to vector<8x32xf32>
    %105 = vector.extract_strided_slice %102 {offsets = [0, 64], sizes = [8, 32], strides = [1, 1]} : vector<8x128xf32> to vector<8x32xf32>
    %106 = vector.extract_strided_slice %102 {offsets = [0, 96], sizes = [8, 32], strides = [1, 1]} : vector<8x128xf32> to vector<8x32xf32>
    %107 = arith.mulf %104, %85 : vector<8x32xf32>
    %108 = arith.mulf %103, %105 : vector<8x32xf32>
    %109 = arith.addf %107, %108 : vector<8x32xf32>
    %110 = math.tanh %109 : vector<8x32xf32>
    %111 = arith.mulf %106, %110 : vector<8x32xf32>
    %112 = arith.index_cast %91 : i32 to index
    %c0_31 = arith.constant 0 : index
    %113 = vector.load %arg5[%112, %c0_31] : memref<64x32xf32, #tpu.memory_space<vmem>>, vector<8x32xf32>
    tpu.vector_store %arg5[%112, %c0_31], %111 {strides = array<i32>} : memref<64x32xf32, #tpu.memory_space<vmem>>, vector<8x32xf32>,
    %c4_i32 = arith.constant 4 : i32
    %c8_i32_32 = arith.constant 8 : i32
    %114 = arith.muli %c4_i32, %c8_i32_32 : i32
    %115 = tpu.assume_multiple %114, 8 : i32
    %116 = arith.index_cast %115 : i32 to index
    %c0_33 = arith.constant 0 : index
    %117 = vector.load %arg8[%116, %c0_33] : memref<64x128xf32, #tpu.memory_space<vmem>>, vector<8x128xf32>
    %cst_34 = arith.constant dense<0.000000e+00> : vector<8x128xf32>
    %118 = tpu.matmul %111, %15, %cst_34 {dimension_numbers = #tpu.dot_dimension_numbers<[1], [0], [0], [1], [0, 0, 1, 1], [], []>} : vector<8x32xf32>, vector<32x128xf32>, vector<8x128xf32> -> vector<8x128xf32>
    %119 = arith.addf %117, %118 : vector<8x128xf32>
    %120 = math.tanh %119 : vector<8x128xf32>
    %121 = arith.negf %119 : vector<8x128xf32>
    %122 = math.exp %121 : vector<8x128xf32>
    %cst_35 = arith.constant 1.000000e+00 : f32
    %123 = vector.broadcast %cst_35 : f32 to vector<8x128xf32>
    %124 = arith.addf %123, %122 : vector<8x128xf32>
    %125 = arith.divf %123, %124 : vector<8x128xf32>
    %126 = arith.select %5, %120, %125 : vector<8x128xi1>, vector<8x128xf32>
    %127 = vector.extract_strided_slice %126 {offsets = [0, 0], sizes = [8, 32], strides = [1, 1]} : vector<8x128xf32> to vector<8x32xf32>
    %128 = vector.extract_strided_slice %126 {offsets = [0, 32], sizes = [8, 32], strides = [1, 1]} : vector<8x128xf32> to vector<8x32xf32>
    %129 = vector.extract_strided_slice %126 {offsets = [0, 64], sizes = [8, 32], strides = [1, 1]} : vector<8x128xf32> to vector<8x32xf32>
    %130 = vector.extract_strided_slice %126 {offsets = [0, 96], sizes = [8, 32], strides = [1, 1]} : vector<8x128xf32> to vector<8x32xf32>
    %131 = arith.mulf %128, %109 : vector<8x32xf32>
    %132 = arith.mulf %127, %129 : vector<8x32xf32>
    %133 = arith.addf %131, %132 : vector<8x32xf32>
    %134 = math.tanh %133 : vector<8x32xf32>
    %135 = arith.mulf %130, %134 : vector<8x32xf32>
    %136 = arith.index_cast %115 : i32 to index
    %c0_36 = arith.constant 0 : index
    %137 = vector.load %arg5[%136, %c0_36] : memref<64x32xf32, #tpu.memory_space<vmem>>, vector<8x32xf32>
    tpu.vector_store %arg5[%136, %c0_36], %135 {strides = array<i32>} : memref<64x32xf32, #tpu.memory_space<vmem>>, vector<8x32xf32>,
    %c5_i32 = arith.constant 5 : i32
    %c8_i32_37 = arith.constant 8 : i32
    %138 = arith.muli %c5_i32, %c8_i32_37 : i32
    %139 = tpu.assume_multiple %138, 8 : i32
    %140 = arith.index_cast %139 : i32 to index
    %c0_38 = arith.constant 0 : index
    %141 = vector.load %arg8[%140, %c0_38] : memref<64x128xf32, #tpu.memory_space<vmem>>, vector<8x128xf32>
    %cst_39 = arith.constant dense<0.000000e+00> : vector<8x128xf32>
    %142 = tpu.matmul %135, %15, %cst_39 {dimension_numbers = #tpu.dot_dimension_numbers<[1], [0], [0], [1], [0, 0, 1, 1], [], []>} : vector<8x32xf32>, vector<32x128xf32>, vector<8x128xf32> -> vector<8x128xf32>
    %143 = arith.addf %141, %142 : vector<8x128xf32>
    %144 = math.tanh %143 : vector<8x128xf32>
    %145 = arith.negf %143 : vector<8x128xf32>
    %146 = math.exp %145 : vector<8x128xf32>
    %cst_40 = arith.constant 1.000000e+00 : f32
    %147 = vector.broadcast %cst_40 : f32 to vector<8x128xf32>
    %148 = arith.addf %147, %146 : vector<8x128xf32>
    %149 = arith.divf %147, %148 : vector<8x128xf32>
    %150 = arith.select %5, %144, %149 : vector<8x128xi1>, vector<8x128xf32>
    %151 = vector.extract_strided_slice %150 {offsets = [0, 0], sizes = [8, 32], strides = [1, 1]} : vector<8x128xf32> to vector<8x32xf32>
    %152 = vector.extract_strided_slice %150 {offsets = [0, 32], sizes = [8, 32], strides = [1, 1]} : vector<8x128xf32> to vector<8x32xf32>
    %153 = vector.extract_strided_slice %150 {offsets = [0, 64], sizes = [8, 32], strides = [1, 1]} : vector<8x128xf32> to vector<8x32xf32>
    %154 = vector.extract_strided_slice %150 {offsets = [0, 96], sizes = [8, 32], strides = [1, 1]} : vector<8x128xf32> to vector<8x32xf32>
    %155 = arith.mulf %152, %133 : vector<8x32xf32>
    %156 = arith.mulf %151, %153 : vector<8x32xf32>
    %157 = arith.addf %155, %156 : vector<8x32xf32>
    %158 = math.tanh %157 : vector<8x32xf32>
    %159 = arith.mulf %154, %158 : vector<8x32xf32>
    %160 = arith.index_cast %139 : i32 to index
    %c0_41 = arith.constant 0 : index
    %161 = vector.load %arg5[%160, %c0_41] : memref<64x32xf32, #tpu.memory_space<vmem>>, vector<8x32xf32>
    tpu.vector_store %arg5[%160, %c0_41], %159 {strides = array<i32>} : memref<64x32xf32, #tpu.memory_space<vmem>>, vector<8x32xf32>,
    %c6_i32 = arith.constant 6 : i32
    %c8_i32_42 = arith.constant 8 : i32
    %162 = arith.muli %c6_i32, %c8_i32_42 : i32
    %163 = tpu.assume_multiple %162, 8 : i32
    %164 = arith.index_cast %163 : i32 to index
    %c0_43 = arith.constant 0 : index
    %165 = vector.load %arg8[%164, %c0_43] : memref<64x128xf32, #tpu.memory_space<vmem>>, vector<8x128xf32>
    %cst_44 = arith.constant dense<0.000000e+00> : vector<8x128xf32>
    %166 = tpu.matmul %159, %15, %cst_44 {dimension_numbers = #tpu.dot_dimension_numbers<[1], [0], [0], [1], [0, 0, 1, 1], [], []>} : vector<8x32xf32>, vector<32x128xf32>, vector<8x128xf32> -> vector<8x128xf32>
    %167 = arith.addf %165, %166 : vector<8x128xf32>
    %168 = math.tanh %167 : vector<8x128xf32>
    %169 = arith.negf %167 : vector<8x128xf32>
    %170 = math.exp %169 : vector<8x128xf32>
    %cst_45 = arith.constant 1.000000e+00 : f32
    %171 = vector.broadcast %cst_45 : f32 to vector<8x128xf32>
    %172 = arith.addf %171, %170 : vector<8x128xf32>
    %173 = arith.divf %171, %172 : vector<8x128xf32>
    %174 = arith.select %5, %168, %173 : vector<8x128xi1>, vector<8x128xf32>
    %175 = vector.extract_strided_slice %174 {offsets = [0, 0], sizes = [8, 32], strides = [1, 1]} : vector<8x128xf32> to vector<8x32xf32>
    %176 = vector.extract_strided_slice %174 {offsets = [0, 32], sizes = [8, 32], strides = [1, 1]} : vector<8x128xf32> to vector<8x32xf32>
    %177 = vector.extract_strided_slice %174 {offsets = [0, 64], sizes = [8, 32], strides = [1, 1]} : vector<8x128xf32> to vector<8x32xf32>
    %178 = vector.extract_strided_slice %174 {offsets = [0, 96], sizes = [8, 32], strides = [1, 1]} : vector<8x128xf32> to vector<8x32xf32>
    %179 = arith.mulf %176, %157 : vector<8x32xf32>
    %180 = arith.mulf %175, %177 : vector<8x32xf32>
    %181 = arith.addf %179, %180 : vector<8x32xf32>
    %182 = math.tanh %181 : vector<8x32xf32>
    %183 = arith.mulf %178, %182 : vector<8x32xf32>
    %184 = arith.index_cast %163 : i32 to index
    %c0_46 = arith.constant 0 : index
    %185 = vector.load %arg5[%184, %c0_46] : memref<64x32xf32, #tpu.memory_space<vmem>>, vector<8x32xf32>
    tpu.vector_store %arg5[%184, %c0_46], %183 {strides = array<i32>} : memref<64x32xf32, #tpu.memory_space<vmem>>, vector<8x32xf32>,
    %c7_i32 = arith.constant 7 : i32
    %c8_i32_47 = arith.constant 8 : i32
    %186 = arith.muli %c7_i32, %c8_i32_47 : i32
    %187 = tpu.assume_multiple %186, 8 : i32
    %188 = arith.index_cast %187 : i32 to index
    %c0_48 = arith.constant 0 : index
    %189 = vector.load %arg8[%188, %c0_48] : memref<64x128xf32, #tpu.memory_space<vmem>>, vector<8x128xf32>
    %cst_49 = arith.constant dense<0.000000e+00> : vector<8x128xf32>
    %190 = tpu.matmul %183, %15, %cst_49 {dimension_numbers = #tpu.dot_dimension_numbers<[1], [0], [0], [1], [0, 0, 1, 1], [], []>} : vector<8x32xf32>, vector<32x128xf32>, vector<8x128xf32> -> vector<8x128xf32>
    %191 = arith.addf %189, %190 : vector<8x128xf32>
    %192 = math.tanh %191 : vector<8x128xf32>
    %193 = arith.negf %191 : vector<8x128xf32>
    %194 = math.exp %193 : vector<8x128xf32>
    %cst_50 = arith.constant 1.000000e+00 : f32
    %195 = vector.broadcast %cst_50 : f32 to vector<8x128xf32>
    %196 = arith.addf %195, %194 : vector<8x128xf32>
    %197 = arith.divf %195, %196 : vector<8x128xf32>
    %198 = arith.select %5, %192, %197 : vector<8x128xi1>, vector<8x128xf32>
    %199 = vector.extract_strided_slice %198 {offsets = [0, 0], sizes = [8, 32], strides = [1, 1]} : vector<8x128xf32> to vector<8x32xf32>
    %200 = vector.extract_strided_slice %198 {offsets = [0, 32], sizes = [8, 32], strides = [1, 1]} : vector<8x128xf32> to vector<8x32xf32>
    %201 = vector.extract_strided_slice %198 {offsets = [0, 64], sizes = [8, 32], strides = [1, 1]} : vector<8x128xf32> to vector<8x32xf32>
    %202 = vector.extract_strided_slice %198 {offsets = [0, 96], sizes = [8, 32], strides = [1, 1]} : vector<8x128xf32> to vector<8x32xf32>
    %203 = arith.mulf %200, %181 : vector<8x32xf32>
    %204 = arith.mulf %199, %201 : vector<8x32xf32>
    %205 = arith.addf %203, %204 : vector<8x32xf32>
    %206 = math.tanh %205 : vector<8x32xf32>
    %207 = arith.mulf %202, %206 : vector<8x32xf32>
    %208 = arith.index_cast %187 : i32 to index
    %c0_51 = arith.constant 0 : index
    %209 = vector.load %arg5[%208, %c0_51] : memref<64x32xf32, #tpu.memory_space<vmem>>, vector<8x32xf32>
    tpu.vector_store %arg5[%208, %c0_51], %207 {strides = array<i32>} : memref<64x32xf32, #tpu.memory_space<vmem>>, vector<8x32xf32>,
    %c8_i32_52 = arith.constant 8 : i32
    %c0_53 = arith.constant 0 : index
    %c0_54 = arith.constant 0 : index
    %c0_55 = arith.constant 0 : index
    %210 = vector.load %arg6[%c0_53, %c0_54, %c0_55] : memref<2x8x32xf32, #tpu.memory_space<vmem>>, vector<1x8x32xf32>
    %211 = vector.shape_cast %210 : vector<1x8x32xf32> to vector<8x32xf32>
    %212 = vector.shape_cast %207 : vector<8x32xf32> to vector<1x8x32xf32>
    tpu.vector_store %arg6[%c0_53, %c0_54, %c0_55], %212 {strides = array<i32>} : memref<2x8x32xf32, #tpu.memory_space<vmem>>, vector<1x8x32xf32>,
    %c0_56 = arith.constant 0 : index
    %c0_57 = arith.constant 0 : index
    %c0_58 = arith.constant 0 : index
    %213 = vector.load %arg7[%c0_56, %c0_57, %c0_58] : memref<2x8x32xf32, #tpu.memory_space<vmem>>, vector<1x8x32xf32>
    %214 = vector.shape_cast %213 : vector<1x8x32xf32> to vector<8x32xf32>
    %215 = vector.shape_cast %205 : vector<8x32xf32> to vector<1x8x32xf32>
    tpu.vector_store %arg7[%c0_56, %c0_57, %c0_58], %215 {strides = array<i32>} : memref<2x8x32xf32, #tpu.memory_space<vmem>>, vector<1x8x32xf32>,
    %c0_59 = arith.constant 0 : index
    %c0_60 = arith.constant 0 : index
    %216 = vector.load %arg5[%c0_59, %c0_60] : memref<64x32xf32, #tpu.memory_space<vmem>>, vector<64x32xf32>
    %c1 = arith.constant 1 : index
    %c0_61 = arith.constant 0 : index
    %c0_62 = arith.constant 0 : index
    %217 = vector.load %arg2[%c1, %c0_61, %c0_62] : memref<2x32x128xf32, #tpu.memory_space<vmem>>, vector<1x32x128xf32>
    %218 = vector.shape_cast %217 : vector<1x32x128xf32> to vector<32x128xf32>
    %cst_63 = arith.constant dense<0.000000e+00> : vector<64x128xf32>
    %219 = tpu.matmul %216, %218, %cst_63 {dimension_numbers = #tpu.dot_dimension_numbers<[1], [0], [0], [1], [0, 0, 1, 1], [], []>} : vector<64x32xf32>, vector<32x128xf32>, vector<64x128xf32> -> vector<64x128xf32>
    %c1_64 = arith.constant 1 : index
    %c0_65 = arith.constant 0 : index
    %c0_66 = arith.constant 0 : index
    %220 = vector.load %arg4[%c1_64, %c0_65, %c0_66] : memref<2x1x128xf32, #tpu.memory_space<vmem>>, vector<1x1x128xf32>
    %221 = vector.shape_cast %220 : vector<1x1x128xf32> to vector<1x128xf32>
    %222 = vector.broadcast %221 : vector<1x128xf32> to vector<64x128xf32>
    %223 = arith.addf %219, %222 : vector<64x128xf32>
    %c0_67 = arith.constant 0 : index
    %c0_68 = arith.constant 0 : index
    %224 = vector.load %arg8[%c0_67, %c0_68] : memref<64x128xf32, #tpu.memory_space<vmem>>, vector<64x128xf32>
    tpu.vector_store %arg8[%c0_67, %c0_68], %223 {strides = array<i32>} : memref<64x128xf32, #tpu.memory_space<vmem>>, vector<64x128xf32>,
    %c1_69 = arith.constant 1 : index
    %c0_70 = arith.constant 0 : index
    %c0_71 = arith.constant 0 : index
    %225 = vector.load %arg3[%c1_69, %c0_70, %c0_71] : memref<2x32x128xf32, #tpu.memory_space<vmem>>, vector<1x32x128xf32>
    %226 = vector.shape_cast %225 : vector<1x32x128xf32> to vector<32x128xf32>
    %cst_72 = arith.constant 0.000000e+00 : f32
    %227 = vector.broadcast %cst_72 : f32 to vector<8x32xf32>
    %cst_73 = arith.constant 0.000000e+00 : f32
    %228 = vector.broadcast %cst_73 : f32 to vector<8x32xf32>
    %c0_i32_74 = arith.constant 0 : i32
    %c8_i32_75 = arith.constant 8 : i32
    %229 = arith.muli %c0_i32_74, %c8_i32_75 : i32
    %230 = tpu.assume_multiple %229, 8 : i32
    %231 = arith.index_cast %230 : i32 to index
    %c0_76 = arith.constant 0 : index
    %232 = vector.load %arg8[%231, %c0_76] : memref<64x128xf32, #tpu.memory_space<vmem>>, vector<8x128xf32>
    %cst_77 = arith.constant dense<0.000000e+00> : vector<8x128xf32>
    %233 = tpu.matmul %227, %226, %cst_77 {dimension_numbers = #tpu.dot_dimension_numbers<[1], [0], [0], [1], [0, 0, 1, 1], [], []>} : vector<8x32xf32>, vector<32x128xf32>, vector<8x128xf32> -> vector<8x128xf32>
    %234 = arith.addf %232, %233 : vector<8x128xf32>
    %235 = math.tanh %234 : vector<8x128xf32>
    %236 = arith.negf %234 : vector<8x128xf32>
    %237 = math.exp %236 : vector<8x128xf32>
    %cst_78 = arith.constant 1.000000e+00 : f32
    %238 = vector.broadcast %cst_78 : f32 to vector<8x128xf32>
    %239 = arith.addf %238, %237 : vector<8x128xf32>
    %240 = arith.divf %238, %239 : vector<8x128xf32>
    %241 = arith.select %5, %235, %240 : vector<8x128xi1>, vector<8x128xf32>
    %242 = vector.extract_strided_slice %241 {offsets = [0, 0], sizes = [8, 32], strides = [1, 1]} : vector<8x128xf32> to vector<8x32xf32>
    %243 = vector.extract_strided_slice %241 {offsets = [0, 32], sizes = [8, 32], strides = [1, 1]} : vector<8x128xf32> to vector<8x32xf32>
    %244 = vector.extract_strided_slice %241 {offsets = [0, 64], sizes = [8, 32], strides = [1, 1]} : vector<8x128xf32> to vector<8x32xf32>
    %245 = vector.extract_strided_slice %241 {offsets = [0, 96], sizes = [8, 32], strides = [1, 1]} : vector<8x128xf32> to vector<8x32xf32>
    %246 = arith.mulf %243, %228 : vector<8x32xf32>
    %247 = arith.mulf %242, %244 : vector<8x32xf32>
    %248 = arith.addf %246, %247 : vector<8x32xf32>
    %249 = math.tanh %248 : vector<8x32xf32>
    %250 = arith.mulf %245, %249 : vector<8x32xf32>
    %251 = arith.index_cast %230 : i32 to index
    %c0_79 = arith.constant 0 : index
    %252 = vector.load %arg5[%251, %c0_79] : memref<64x32xf32, #tpu.memory_space<vmem>>, vector<8x32xf32>
    tpu.vector_store %arg5[%251, %c0_79], %250 {strides = array<i32>} : memref<64x32xf32, #tpu.memory_space<vmem>>, vector<8x32xf32>,
    %c1_i32_80 = arith.constant 1 : i32
    %c8_i32_81 = arith.constant 8 : i32
    %253 = arith.muli %c1_i32_80, %c8_i32_81 : i32
    %254 = tpu.assume_multiple %253, 8 : i32
    %255 = arith.index_cast %254 : i32 to index
    %c0_82 = arith.constant 0 : index
    %256 = vector.load %arg8[%255, %c0_82] : memref<64x128xf32, #tpu.memory_space<vmem>>, vector<8x128xf32>
    %cst_83 = arith.constant dense<0.000000e+00> : vector<8x128xf32>
    %257 = tpu.matmul %250, %226, %cst_83 {dimension_numbers = #tpu.dot_dimension_numbers<[1], [0], [0], [1], [0, 0, 1, 1], [], []>} : vector<8x32xf32>, vector<32x128xf32>, vector<8x128xf32> -> vector<8x128xf32>
    %258 = arith.addf %256, %257 : vector<8x128xf32>
    %259 = math.tanh %258 : vector<8x128xf32>
    %260 = arith.negf %258 : vector<8x128xf32>
    %261 = math.exp %260 : vector<8x128xf32>
    %cst_84 = arith.constant 1.000000e+00 : f32
    %262 = vector.broadcast %cst_84 : f32 to vector<8x128xf32>
    %263 = arith.addf %262, %261 : vector<8x128xf32>
    %264 = arith.divf %262, %263 : vector<8x128xf32>
    %265 = arith.select %5, %259, %264 : vector<8x128xi1>, vector<8x128xf32>
    %266 = vector.extract_strided_slice %265 {offsets = [0, 0], sizes = [8, 32], strides = [1, 1]} : vector<8x128xf32> to vector<8x32xf32>
    %267 = vector.extract_strided_slice %265 {offsets = [0, 32], sizes = [8, 32], strides = [1, 1]} : vector<8x128xf32> to vector<8x32xf32>
    %268 = vector.extract_strided_slice %265 {offsets = [0, 64], sizes = [8, 32], strides = [1, 1]} : vector<8x128xf32> to vector<8x32xf32>
    %269 = vector.extract_strided_slice %265 {offsets = [0, 96], sizes = [8, 32], strides = [1, 1]} : vector<8x128xf32> to vector<8x32xf32>
    %270 = arith.mulf %267, %248 : vector<8x32xf32>
    %271 = arith.mulf %266, %268 : vector<8x32xf32>
    %272 = arith.addf %270, %271 : vector<8x32xf32>
    %273 = math.tanh %272 : vector<8x32xf32>
    %274 = arith.mulf %269, %273 : vector<8x32xf32>
    %275 = arith.index_cast %254 : i32 to index
    %c0_85 = arith.constant 0 : index
    %276 = vector.load %arg5[%275, %c0_85] : memref<64x32xf32, #tpu.memory_space<vmem>>, vector<8x32xf32>
    tpu.vector_store %arg5[%275, %c0_85], %274 {strides = array<i32>} : memref<64x32xf32, #tpu.memory_space<vmem>>, vector<8x32xf32>,
    %c2_i32_86 = arith.constant 2 : i32
    %c8_i32_87 = arith.constant 8 : i32
    %277 = arith.muli %c2_i32_86, %c8_i32_87 : i32
    %278 = tpu.assume_multiple %277, 8 : i32
    %279 = arith.index_cast %278 : i32 to index
    %c0_88 = arith.constant 0 : index
    %280 = vector.load %arg8[%279, %c0_88] : memref<64x128xf32, #tpu.memory_space<vmem>>, vector<8x128xf32>
    %cst_89 = arith.constant dense<0.000000e+00> : vector<8x128xf32>
    %281 = tpu.matmul %274, %226, %cst_89 {dimension_numbers = #tpu.dot_dimension_numbers<[1], [0], [0], [1], [0, 0, 1, 1], [], []>} : vector<8x32xf32>, vector<32x128xf32>, vector<8x128xf32> -> vector<8x128xf32>
    %282 = arith.addf %280, %281 : vector<8x128xf32>
    %283 = math.tanh %282 : vector<8x128xf32>
    %284 = arith.negf %282 : vector<8x128xf32>
    %285 = math.exp %284 : vector<8x128xf32>
    %cst_90 = arith.constant 1.000000e+00 : f32
    %286 = vector.broadcast %cst_90 : f32 to vector<8x128xf32>
    %287 = arith.addf %286, %285 : vector<8x128xf32>
    %288 = arith.divf %286, %287 : vector<8x128xf32>
    %289 = arith.select %5, %283, %288 : vector<8x128xi1>, vector<8x128xf32>
    %290 = vector.extract_strided_slice %289 {offsets = [0, 0], sizes = [8, 32], strides = [1, 1]} : vector<8x128xf32> to vector<8x32xf32>
    %291 = vector.extract_strided_slice %289 {offsets = [0, 32], sizes = [8, 32], strides = [1, 1]} : vector<8x128xf32> to vector<8x32xf32>
    %292 = vector.extract_strided_slice %289 {offsets = [0, 64], sizes = [8, 32], strides = [1, 1]} : vector<8x128xf32> to vector<8x32xf32>
    %293 = vector.extract_strided_slice %289 {offsets = [0, 96], sizes = [8, 32], strides = [1, 1]} : vector<8x128xf32> to vector<8x32xf32>
    %294 = arith.mulf %291, %272 : vector<8x32xf32>
    %295 = arith.mulf %290, %292 : vector<8x32xf32>
    %296 = arith.addf %294, %295 : vector<8x32xf32>
    %297 = math.tanh %296 : vector<8x32xf32>
    %298 = arith.mulf %293, %297 : vector<8x32xf32>
    %299 = arith.index_cast %278 : i32 to index
    %c0_91 = arith.constant 0 : index
    %300 = vector.load %arg5[%299, %c0_91] : memref<64x32xf32, #tpu.memory_space<vmem>>, vector<8x32xf32>
    tpu.vector_store %arg5[%299, %c0_91], %298 {strides = array<i32>} : memref<64x32xf32, #tpu.memory_space<vmem>>, vector<8x32xf32>,
    %c3_i32_92 = arith.constant 3 : i32
    %c8_i32_93 = arith.constant 8 : i32
    %301 = arith.muli %c3_i32_92, %c8_i32_93 : i32
    %302 = tpu.assume_multiple %301, 8 : i32
    %303 = arith.index_cast %302 : i32 to index
    %c0_94 = arith.constant 0 : index
    %304 = vector.load %arg8[%303, %c0_94] : memref<64x128xf32, #tpu.memory_space<vmem>>, vector<8x128xf32>
    %cst_95 = arith.constant dense<0.000000e+00> : vector<8x128xf32>
    %305 = tpu.matmul %298, %226, %cst_95 {dimension_numbers = #tpu.dot_dimension_numbers<[1], [0], [0], [1], [0, 0, 1, 1], [], []>} : vector<8x32xf32>, vector<32x128xf32>, vector<8x128xf32> -> vector<8x128xf32>
    %306 = arith.addf %304, %305 : vector<8x128xf32>
    %307 = math.tanh %306 : vector<8x128xf32>
    %308 = arith.negf %306 : vector<8x128xf32>
    %309 = math.exp %308 : vector<8x128xf32>
    %cst_96 = arith.constant 1.000000e+00 : f32
    %310 = vector.broadcast %cst_96 : f32 to vector<8x128xf32>
    %311 = arith.addf %310, %309 : vector<8x128xf32>
    %312 = arith.divf %310, %311 : vector<8x128xf32>
    %313 = arith.select %5, %307, %312 : vector<8x128xi1>, vector<8x128xf32>
    %314 = vector.extract_strided_slice %313 {offsets = [0, 0], sizes = [8, 32], strides = [1, 1]} : vector<8x128xf32> to vector<8x32xf32>
    %315 = vector.extract_strided_slice %313 {offsets = [0, 32], sizes = [8, 32], strides = [1, 1]} : vector<8x128xf32> to vector<8x32xf32>
    %316 = vector.extract_strided_slice %313 {offsets = [0, 64], sizes = [8, 32], strides = [1, 1]} : vector<8x128xf32> to vector<8x32xf32>
    %317 = vector.extract_strided_slice %313 {offsets = [0, 96], sizes = [8, 32], strides = [1, 1]} : vector<8x128xf32> to vector<8x32xf32>
    %318 = arith.mulf %315, %296 : vector<8x32xf32>
    %319 = arith.mulf %314, %316 : vector<8x32xf32>
    %320 = arith.addf %318, %319 : vector<8x32xf32>
    %321 = math.tanh %320 : vector<8x32xf32>
    %322 = arith.mulf %317, %321 : vector<8x32xf32>
    %323 = arith.index_cast %302 : i32 to index
    %c0_97 = arith.constant 0 : index
    %324 = vector.load %arg5[%323, %c0_97] : memref<64x32xf32, #tpu.memory_space<vmem>>, vector<8x32xf32>
    tpu.vector_store %arg5[%323, %c0_97], %322 {strides = array<i32>} : memref<64x32xf32, #tpu.memory_space<vmem>>, vector<8x32xf32>,
    %c4_i32_98 = arith.constant 4 : i32
    %c8_i32_99 = arith.constant 8 : i32
    %325 = arith.muli %c4_i32_98, %c8_i32_99 : i32
    %326 = tpu.assume_multiple %325, 8 : i32
    %327 = arith.index_cast %326 : i32 to index
    %c0_100 = arith.constant 0 : index
    %328 = vector.load %arg8[%327, %c0_100] : memref<64x128xf32, #tpu.memory_space<vmem>>, vector<8x128xf32>
    %cst_101 = arith.constant dense<0.000000e+00> : vector<8x128xf32>
    %329 = tpu.matmul %322, %226, %cst_101 {dimension_numbers = #tpu.dot_dimension_numbers<[1], [0], [0], [1], [0, 0, 1, 1], [], []>} : vector<8x32xf32>, vector<32x128xf32>, vector<8x128xf32> -> vector<8x128xf32>
    %330 = arith.addf %328, %329 : vector<8x128xf32>
    %331 = math.tanh %330 : vector<8x128xf32>
    %332 = arith.negf %330 : vector<8x128xf32>
    %333 = math.exp %332 : vector<8x128xf32>
    %cst_102 = arith.constant 1.000000e+00 : f32
    %334 = vector.broadcast %cst_102 : f32 to vector<8x128xf32>
    %335 = arith.addf %334, %333 : vector<8x128xf32>
    %336 = arith.divf %334, %335 : vector<8x128xf32>
    %337 = arith.select %5, %331, %336 : vector<8x128xi1>, vector<8x128xf32>
    %338 = vector.extract_strided_slice %337 {offsets = [0, 0], sizes = [8, 32], strides = [1, 1]} : vector<8x128xf32> to vector<8x32xf32>
    %339 = vector.extract_strided_slice %337 {offsets = [0, 32], sizes = [8, 32], strides = [1, 1]} : vector<8x128xf32> to vector<8x32xf32>
    %340 = vector.extract_strided_slice %337 {offsets = [0, 64], sizes = [8, 32], strides = [1, 1]} : vector<8x128xf32> to vector<8x32xf32>
    %341 = vector.extract_strided_slice %337 {offsets = [0, 96], sizes = [8, 32], strides = [1, 1]} : vector<8x128xf32> to vector<8x32xf32>
    %342 = arith.mulf %339, %320 : vector<8x32xf32>
    %343 = arith.mulf %338, %340 : vector<8x32xf32>
    %344 = arith.addf %342, %343 : vector<8x32xf32>
    %345 = math.tanh %344 : vector<8x32xf32>
    %346 = arith.mulf %341, %345 : vector<8x32xf32>
    %347 = arith.index_cast %326 : i32 to index
    %c0_103 = arith.constant 0 : index
    %348 = vector.load %arg5[%347, %c0_103] : memref<64x32xf32, #tpu.memory_space<vmem>>, vector<8x32xf32>
    tpu.vector_store %arg5[%347, %c0_103], %346 {strides = array<i32>} : memref<64x32xf32, #tpu.memory_space<vmem>>, vector<8x32xf32>,
    %c5_i32_104 = arith.constant 5 : i32
    %c8_i32_105 = arith.constant 8 : i32
    %349 = arith.muli %c5_i32_104, %c8_i32_105 : i32
    %350 = tpu.assume_multiple %349, 8 : i32
    %351 = arith.index_cast %350 : i32 to index
    %c0_106 = arith.constant 0 : index
    %352 = vector.load %arg8[%351, %c0_106] : memref<64x128xf32, #tpu.memory_space<vmem>>, vector<8x128xf32>
    %cst_107 = arith.constant dense<0.000000e+00> : vector<8x128xf32>
    %353 = tpu.matmul %346, %226, %cst_107 {dimension_numbers = #tpu.dot_dimension_numbers<[1], [0], [0], [1], [0, 0, 1, 1], [], []>} : vector<8x32xf32>, vector<32x128xf32>, vector<8x128xf32> -> vector<8x128xf32>
    %354 = arith.addf %352, %353 : vector<8x128xf32>
    %355 = math.tanh %354 : vector<8x128xf32>
    %356 = arith.negf %354 : vector<8x128xf32>
    %357 = math.exp %356 : vector<8x128xf32>
    %cst_108 = arith.constant 1.000000e+00 : f32
    %358 = vector.broadcast %cst_108 : f32 to vector<8x128xf32>
    %359 = arith.addf %358, %357 : vector<8x128xf32>
    %360 = arith.divf %358, %359 : vector<8x128xf32>
    %361 = arith.select %5, %355, %360 : vector<8x128xi1>, vector<8x128xf32>
    %362 = vector.extract_strided_slice %361 {offsets = [0, 0], sizes = [8, 32], strides = [1, 1]} : vector<8x128xf32> to vector<8x32xf32>
    %363 = vector.extract_strided_slice %361 {offsets = [0, 32], sizes = [8, 32], strides = [1, 1]} : vector<8x128xf32> to vector<8x32xf32>
    %364 = vector.extract_strided_slice %361 {offsets = [0, 64], sizes = [8, 32], strides = [1, 1]} : vector<8x128xf32> to vector<8x32xf32>
    %365 = vector.extract_strided_slice %361 {offsets = [0, 96], sizes = [8, 32], strides = [1, 1]} : vector<8x128xf32> to vector<8x32xf32>
    %366 = arith.mulf %363, %344 : vector<8x32xf32>
    %367 = arith.mulf %362, %364 : vector<8x32xf32>
    %368 = arith.addf %366, %367 : vector<8x32xf32>
    %369 = math.tanh %368 : vector<8x32xf32>
    %370 = arith.mulf %365, %369 : vector<8x32xf32>
    %371 = arith.index_cast %350 : i32 to index
    %c0_109 = arith.constant 0 : index
    %372 = vector.load %arg5[%371, %c0_109] : memref<64x32xf32, #tpu.memory_space<vmem>>, vector<8x32xf32>
    tpu.vector_store %arg5[%371, %c0_109], %370 {strides = array<i32>} : memref<64x32xf32, #tpu.memory_space<vmem>>, vector<8x32xf32>,
    %c6_i32_110 = arith.constant 6 : i32
    %c8_i32_111 = arith.constant 8 : i32
    %373 = arith.muli %c6_i32_110, %c8_i32_111 : i32
    %374 = tpu.assume_multiple %373, 8 : i32
    %375 = arith.index_cast %374 : i32 to index
    %c0_112 = arith.constant 0 : index
    %376 = vector.load %arg8[%375, %c0_112] : memref<64x128xf32, #tpu.memory_space<vmem>>, vector<8x128xf32>
    %cst_113 = arith.constant dense<0.000000e+00> : vector<8x128xf32>
    %377 = tpu.matmul %370, %226, %cst_113 {dimension_numbers = #tpu.dot_dimension_numbers<[1], [0], [0], [1], [0, 0, 1, 1], [], []>} : vector<8x32xf32>, vector<32x128xf32>, vector<8x128xf32> -> vector<8x128xf32>
    %378 = arith.addf %376, %377 : vector<8x128xf32>
    %379 = math.tanh %378 : vector<8x128xf32>
    %380 = arith.negf %378 : vector<8x128xf32>
    %381 = math.exp %380 : vector<8x128xf32>
    %cst_114 = arith.constant 1.000000e+00 : f32
    %382 = vector.broadcast %cst_114 : f32 to vector<8x128xf32>
    %383 = arith.addf %382, %381 : vector<8x128xf32>
    %384 = arith.divf %382, %383 : vector<8x128xf32>
    %385 = arith.select %5, %379, %384 : vector<8x128xi1>, vector<8x128xf32>
    %386 = vector.extract_strided_slice %385 {offsets = [0, 0], sizes = [8, 32], strides = [1, 1]} : vector<8x128xf32> to vector<8x32xf32>
    %387 = vector.extract_strided_slice %385 {offsets = [0, 32], sizes = [8, 32], strides = [1, 1]} : vector<8x128xf32> to vector<8x32xf32>
    %388 = vector.extract_strided_slice %385 {offsets = [0, 64], sizes = [8, 32], strides = [1, 1]} : vector<8x128xf32> to vector<8x32xf32>
    %389 = vector.extract_strided_slice %385 {offsets = [0, 96], sizes = [8, 32], strides = [1, 1]} : vector<8x128xf32> to vector<8x32xf32>
    %390 = arith.mulf %387, %368 : vector<8x32xf32>
    %391 = arith.mulf %386, %388 : vector<8x32xf32>
    %392 = arith.addf %390, %391 : vector<8x32xf32>
    %393 = math.tanh %392 : vector<8x32xf32>
    %394 = arith.mulf %389, %393 : vector<8x32xf32>
    %395 = arith.index_cast %374 : i32 to index
    %c0_115 = arith.constant 0 : index
    %396 = vector.load %arg5[%395, %c0_115] : memref<64x32xf32, #tpu.memory_space<vmem>>, vector<8x32xf32>
    tpu.vector_store %arg5[%395, %c0_115], %394 {strides = array<i32>} : memref<64x32xf32, #tpu.memory_space<vmem>>, vector<8x32xf32>,
    %c7_i32_116 = arith.constant 7 : i32
    %c8_i32_117 = arith.constant 8 : i32
    %397 = arith.muli %c7_i32_116, %c8_i32_117 : i32
    %398 = tpu.assume_multiple %397, 8 : i32
    %399 = arith.index_cast %398 : i32 to index
    %c0_118 = arith.constant 0 : index
    %400 = vector.load %arg8[%399, %c0_118] : memref<64x128xf32, #tpu.memory_space<vmem>>, vector<8x128xf32>
    %cst_119 = arith.constant dense<0.000000e+00> : vector<8x128xf32>
    %401 = tpu.matmul %394, %226, %cst_119 {dimension_numbers = #tpu.dot_dimension_numbers<[1], [0], [0], [1], [0, 0, 1, 1], [], []>} : vector<8x32xf32>, vector<32x128xf32>, vector<8x128xf32> -> vector<8x128xf32>
    %402 = arith.addf %400, %401 : vector<8x128xf32>
    %403 = math.tanh %402 : vector<8x128xf32>
    %404 = arith.negf %402 : vector<8x128xf32>
    %405 = math.exp %404 : vector<8x128xf32>
    %cst_120 = arith.constant 1.000000e+00 : f32
    %406 = vector.broadcast %cst_120 : f32 to vector<8x128xf32>
    %407 = arith.addf %406, %405 : vector<8x128xf32>
    %408 = arith.divf %406, %407 : vector<8x128xf32>
    %409 = arith.select %5, %403, %408 : vector<8x128xi1>, vector<8x128xf32>
    %410 = vector.extract_strided_slice %409 {offsets = [0, 0], sizes = [8, 32], strides = [1, 1]} : vector<8x128xf32> to vector<8x32xf32>
    %411 = vector.extract_strided_slice %409 {offsets = [0, 32], sizes = [8, 32], strides = [1, 1]} : vector<8x128xf32> to vector<8x32xf32>
    %412 = vector.extract_strided_slice %409 {offsets = [0, 64], sizes = [8, 32], strides = [1, 1]} : vector<8x128xf32> to vector<8x32xf32>
    %413 = vector.extract_strided_slice %409 {offsets = [0, 96], sizes = [8, 32], strides = [1, 1]} : vector<8x128xf32> to vector<8x32xf32>
    %414 = arith.mulf %411, %392 : vector<8x32xf32>
    %415 = arith.mulf %410, %412 : vector<8x32xf32>
    %416 = arith.addf %414, %415 : vector<8x32xf32>
    %417 = math.tanh %416 : vector<8x32xf32>
    %418 = arith.mulf %413, %417 : vector<8x32xf32>
    %419 = arith.index_cast %398 : i32 to index
    %c0_121 = arith.constant 0 : index
    %420 = vector.load %arg5[%419, %c0_121] : memref<64x32xf32, #tpu.memory_space<vmem>>, vector<8x32xf32>
    tpu.vector_store %arg5[%419, %c0_121], %418 {strides = array<i32>} : memref<64x32xf32, #tpu.memory_space<vmem>>, vector<8x32xf32>,
    %c8_i32_122 = arith.constant 8 : i32
    %c1_123 = arith.constant 1 : index
    %c0_124 = arith.constant 0 : index
    %c0_125 = arith.constant 0 : index
    %421 = vector.load %arg6[%c1_123, %c0_124, %c0_125] : memref<2x8x32xf32, #tpu.memory_space<vmem>>, vector<1x8x32xf32>
    %422 = vector.shape_cast %421 : vector<1x8x32xf32> to vector<8x32xf32>
    %423 = vector.shape_cast %418 : vector<8x32xf32> to vector<1x8x32xf32>
    tpu.vector_store %arg6[%c1_123, %c0_124, %c0_125], %423 {strides = array<i32>} : memref<2x8x32xf32, #tpu.memory_space<vmem>>, vector<1x8x32xf32>,
    %c1_126 = arith.constant 1 : index
    %c0_127 = arith.constant 0 : index
    %c0_128 = arith.constant 0 : index
    %424 = vector.load %arg7[%c1_126, %c0_127, %c0_128] : memref<2x8x32xf32, #tpu.memory_space<vmem>>, vector<1x8x32xf32>
    %425 = vector.shape_cast %424 : vector<1x8x32xf32> to vector<8x32xf32>
    %426 = vector.shape_cast %416 : vector<8x32xf32> to vector<1x8x32xf32>
    tpu.vector_store %arg7[%c1_126, %c0_127, %c0_128], %426 {strides = array<i32>} : memref<2x8x32xf32, #tpu.memory_space<vmem>>, vector<1x8x32xf32>,
    return
  }
}

</mosaic_0001>

<llo_original>
// kernel: tpu_custom_call.1
$region0: #{tpu_custom_call.1}
  #allocation0 [shape = 'u32[]', space=smem, size = 0x4, offset = 0x4, fixed_abs, tag = 'smem constant byte address 0x4 - core index']
  #allocation1 [shape = 'u32[72,128]{1,0:T(1,128)}', space=vmem, size = 0x9000, scoped, tag = 'internal scratch']
  #allocation2 [shape = 'f32[64,128]{1,0:T(8,128)}', space=vmem, size = 0x8000, scoped, tag = 'scratch operand']
  %s0 = inlined_call_operand.vmem [shape: f32[64,32], index: 0, kind: input, shape index: {}]
  %s1 = inlined_call_operand.vmem [shape: f32[32,128], index: 1, kind: input, shape index: {}]
  %s2 = inlined_call_operand.vmem [shape: f32[2,32,128], index: 2, kind: input, shape index: {}]
  %s3 = inlined_call_operand.hbm [shape: f32[2,32,128], index: 3, kind: input, shape index: {}]
  %s4 = inlined_call_operand.vmem [shape: f32[2,1,128], index: 4, kind: input, shape index: {}]
  %s5 = inlined_call_operand.vmem [shape: f32[64,32], index: 5, kind: output, shape index: {0}]
  %s6 = inlined_call_operand.hbm [shape: f32[2,8,32], index: 6, kind: output, shape index: {1}]
  %s7 = inlined_call_operand.hbm [shape: f32[2,8,32], index: 7, kind: output, shape index: {2}]
  %8 = xla_tuple %s5, %s6, %s7
  %s9 = sld [smem:[#allocation0]]
  $region50: #{tpu_custom_call.1} parent=0
    _
  %s11 = ssub.s32 1, %s9
  %s12 = scalar_select 0, %s11, %s9
  $region1: #{tpu_custom_call.1} parent=0
    #allocation3 [shape = 'u8[32768]{0}', space=vmem, size = 0x8000, scoped, tag = 'input window, operand 3, single buffered']
    #allocation4 [shape = 's32[1]{0}', space=sflag, size = 0x4, scoped, tag = 'scoped memory for tpu_custom_call.1']
    #allocation5 [shape = 's32[1]{0}', space=sflag, size = 0x4, scoped, tag = 'scoped memory for tpu_custom_call.1']
    #allocation6 [shape = 'u8[8192]{0}', space=vmem, size = 0x2000, scoped, tag = 'output window, operand 1, single buffered']
    #allocation7 [shape = 'u8[8192]{0}', space=vmem, size = 0x2000, scoped, tag = 'output window, operand 2, single buffered']
    #allocation8 [shape = 's32[1]{0}', space=sflag, size = 0x4, scoped, tag = 'scoped memory for tpu_custom_call.1']
    %13 = vsyncpa [#allocation4], 0
    %14 = vsyncpa [#allocation5], 0
    %15 = vsyncpa [#allocation8], 0
    // Predicated region
    $region2: #{tpu_custom_call.1} parent=1 // pred_check
      _
    $region3: #{tpu_custom_call.1} parent=1 // pred_check_branch
      %17 = sbr.rel (0) target = $region5
    $region4: #{tpu_custom_call.1} parent=1 // pred_region
      _
    $region5: #{tpu_custom_call.1} parent=1 // pred_fallthru
      _
    // Predicated region
    $region6: #{tpu_custom_call.1} parent=1 // pred_check
      _
    $region7: #{tpu_custom_call.1} parent=1 // pred_check_branch
      %19 = sbr.rel (0) target = $region9
    $region8: #{tpu_custom_call.1} parent=1 // pred_region
      _
    $region9: #{tpu_custom_call.1} parent=1 // pred_fallthru
      _
    // Predicated region
    $region10: #{tpu_custom_call.1} parent=1 // pred_check
      _
    $region11: #{tpu_custom_call.1} parent=1 // pred_check_branch
      %21 = sbr.rel (0) target = $region13
    $region12: #{tpu_custom_call.1} parent=1 // pred_region
      _
    $region13: #{tpu_custom_call.1} parent=1 // pred_fallthru
      _
    // Predicated region
    $region14: #{tpu_custom_call.1} parent=1 // pred_check
      _
    $region15: #{tpu_custom_call.1} parent=1 // pred_check_branch
      %23 = sbr.rel (0) target = $region17
    $region16: #{tpu_custom_call.1} parent=1 // pred_region
      %25 = vsyncadd [#allocation4], 0
      %s26 = sshll.u32 %s3, 4
      %s27 = int_to_ptr.hbm [resolvable:$true] %s26
      %s28 = sshll.u32 [#allocation3], 4
      %s29 = int_to_ptr.vmem [resolvable:$true] %s28
      %34 = dma.hbm_to_vmem [thread:$0]  %s27, 1024, %s29, [#allocation4], 128, 128, 8
    $region17: #{tpu_custom_call.1} parent=1 // pred_fallthru
      _
    // Predicated region
    $region18: #{tpu_custom_call.1} parent=1 // pred_check
      _
    $region19: #{tpu_custom_call.1} parent=1 // pred_check_branch
      %36 = sbr.rel (0) target = $region21
    $region20: #{tpu_custom_call.1} parent=1 // pred_region
      _
    $region21: #{tpu_custom_call.1} parent=1 // pred_fallthru
      _
    // Predicated region
    $region22: #{tpu_custom_call.1} parent=1 // pred_check
      _
    $region23: #{tpu_custom_call.1} parent=1 // pred_check_branch
      %38 = sbr.rel (0) target = $region25
    $region24: #{tpu_custom_call.1} parent=1 // pred_region
      %40 = dma.done [#allocation4], 1024
    $region25: #{tpu_custom_call.1} parent=1 // pred_fallthru
      _
    %v41 = vlaneseq
    %v42 = vand.u32 %v41, 127
    %vm43 = vcmp.ge.s32.totalorder %v42, 64
    %vm44 = vcmp.lt.s32.totalorder %v42, 96
    %vm45 = vmand %vm43, %vm44
    %v46 = vld [vmem:[%s0] sm:$0xff]
    %v47 = vld [vmem:[%s0 + $0x8] sm:$0xff]
    %v48 = vld [vmem:[%s0 + $0x10] sm:$0xff]
    %v49 = vld [vmem:[%s0 + $0x18] sm:$0xff]
    %v50 = vld [vmem:[%s0 + $0x20] sm:$0xff]
    %v51 = vld [vmem:[%s0 + $0x28] sm:$0xff]
    %v52 = vld [vmem:[%s0 + $0x30] sm:$0xff]
    %v53 = vld [vmem:[%s0 + $0x38] sm:$0xff]
    %v54 = vld [vmem:[%s1] sm:$0xff]
    %v55 = vld [vmem:[%s1 + $0x8] sm:$0xff]
    %v56 = vld [vmem:[%s1 + $0x10] sm:$0xff]
    %v57 = vld [vmem:[%s1 + $0x18] sm:$0xff]
    %v58 = vld [vmem:[%s4] sm:$0x1]
    %v60 = vperm.slane %v58, 0
    %vm62 = vcmask 261120
    %v64 = vsel %vm62, %v46, 0
    %v67 = vsel %vm62, %v47, 0
    %v70 = vsel %vm62, %v48, 0
    %v73 = vsel %vm62, %v49, 0
    %v76 = vsel %vm62, %v50, 0
    %v79 = vsel %vm62, %v51, 0
    %v82 = vsel %vm62, %v52, 0
    %v85 = vsel %vm62, %v53, 0
    %87 = vmatpush.msra.mxu0 0.0
    %88 = vmatpush.msra.mxu0 0.0
    %89 = vmatpush.msra.mxu0 0.0
    %90 = vmatpush.msra.mxu0 0.0
    %91 = vmatpush.msra.mxu0 0.0
    %92 = vmatpush.msra.mxu0 0.0
    %93 = vmatpush.msra.mxu0 0.0
    %94 = vmatpush.msra.mxu0 0.0
    %95 = vmatpush.msra.mxu0 0.0
    %96 = vmatpush.msra.mxu0 0.0
    %97 = vmatpush.msra.mxu0 0.0
    %98 = vmatpush.msra.mxu0 0.0
    %99 = vmatpush.msra.mxu0 %v57
    %100 = vmatpush.msra.mxu0 %v56
    %101 = vmatpush.msra.mxu0 %v55
    %102 = vmatpush.msra.mxu0 %v54
    %103 = vmatmul.f32.gmra.mxu0 %v64
    %v104 = vpop.f32.mrf.mxu0
    %v105 = vadd.f32 %v60, %v104
    %106 = vmatmul.f32.gmra.mxu0 %v67
    %v107 = vpop.f32.mrf.mxu0
    %v108 = vadd.f32 %v60, %v107
    %109 = vmatmul.f32.gmra.mxu0 %v70
    %v110 = vpop.f32.mrf.mxu0
    %v111 = vadd.f32 %v60, %v110
    %112 = vmatmul.f32.gmra.mxu0 %v73
    %v113 = vpop.f32.mrf.mxu0
    %v114 = vadd.f32 %v60, %v113
    %115 = vmatmul.f32.gmra.mxu0 %v76
    %v116 = vpop.f32.mrf.mxu0
    %v117 = vadd.f32 %v60, %v116
    %118 = vmatmul.f32.gmra.mxu0 %v79
    %v119 = vpop.f32.mrf.mxu0
    %v120 = vadd.f32 %v60, %v119
    %121 = vmatmul.f32.gmra.mxu0 %v82
    %v122 = vpop.f32.mrf.mxu0
    %v123 = vadd.f32 %v60, %v122
    %124 = vmatmul.f32.gmra.mxu0 %v85
    %v125 = vpop.f32.mrf.mxu0
    %v126 = vadd.f32 %v60, %v125
    %127 = vdwg.mxu0
    %128 = vst [vmem:[#allocation2] sm:$0xff] %v105
    %129 = vst [vmem:[#allocation2 + $0x8] sm:$0xff] %v108
    %130 = vst [vmem:[#allocation2 + $0x10] sm:$0xff] %v111
    %131 = vst [vmem:[#allocation2 + $0x18] sm:$0xff] %v114
    %132 = vst [vmem:[#allocation2 + $0x20] sm:$0xff] %v117
    %133 = vst [vmem:[#allocation2 + $0x28] sm:$0xff] %v120
    %134 = vst [vmem:[#allocation2 + $0x30] sm:$0xff] %v123
    %135 = vst [vmem:[#allocation2 + $0x38] sm:$0xff] %v126
    %v136 = vld [vmem:[#allocation3] sm:$0xff]
    %v137 = vld [vmem:[#allocation3 + $0x8] sm:$0xff]
    %v138 = vld [vmem:[#allocation3 + $0x10] sm:$0xff]
    %v139 = vld [vmem:[#allocation3 + $0x18] sm:$0xff]
    %v140 = vld [vmem:[#allocation2] sm:$0xff]
    %v142 = vsel %vm62, 0.0, 0
    %144 = vmatpush.msra.mxu0 0.0
    %145 = vmatpush.msra.mxu0 0.0
    %146 = vmatpush.msra.mxu0 0.0
    %147 = vmatpush.msra.mxu0 0.0
    %148 = vmatpush.msra.mxu0 0.0
    %149 = vmatpush.msra.mxu0 0.0
    %150 = vmatpush.msra.mxu0 0.0
    %151 = vmatpush.msra.mxu0 0.0
    %152 = vmatpush.msra.mxu0 0.0
    %153 = vmatpush.msra.mxu0 0.0
    %154 = vmatpush.msra.mxu0 0.0
    %155 = vmatpush.msra.mxu0 0.0
    %156 = vmatpush.msra.mxu0 %v139
    %157 = vmatpush.msra.mxu0 %v138
    %158 = vmatpush.msra.mxu0 %v137
    %159 = vmatpush.msra.mxu0 %v136
    %160 = vmatmul.f32.gmra.mxu0 %v142
    %v161 = vpop.f32.mrf.mxu0
    %v162 = vadd.f32 0.0, %v161
    %163 = vdwg.mxu0
    %v164 = vadd.f32 %v140, %v162
    %v165 = vtanh.pop %v164
    %v166 = vxor.u32 %v164, 2147483648
    %v167 = vmul.f32 %v166, 1.442695
    %v168 = vpow.pop %v167
    %v169 = vadd.f32 %v168, 1.0
    %v170 = vrcp.pop %v169
    %v171 = vmul.f32 %v169, %v170
    %v172 = vsub.f32 1.0, %v171
    %v173 = vmul.f32 %v170, %v172
    %v174 = vadd.f32 %v170, %v173
    %vm175 = vweird.f32 %v169
    %vm176 = vweird.f32 %v170
    %vm177 = vmor %vm175, %vm176
    %v178 = vsel %vm177, %v170, %v174
    %v179 = vand.u32 2147483647, %v169
    %vm180 = vcmp.eq.f32.partialorder %v179, 8.507059e+37
    %v181 = vand.u32 %v169, 2147483648
    %v182 = vor.u32 1.1754944e-38, %v181
    %v183 = vsel %vm180, %v182, %v178
    %v184 = vmul.f32 1.0, %v183
    %v185 = vsel %vm45, %v165, %v184
    %v186 = vmul.f32 %v185, 0.0
    %188 = vrot.lane.b32.xlu0 %v185, 64
    %v189 = vpop.permute.xlu0 %188
    %v191 = vmul.f32 %v185, %v189
    %193 = vrot.lane.b32.xlu0 %v191, 32
    %v194 = vpop.permute.xlu0 %193
    %v196 = vadd.f32 %v186, %v194
    %v197 = vtanh.pop %v196
    %199 = vrot.lane.b32.xlu0 %v197, 64
    %v200 = vpop.permute.xlu0 %199
    %v202 = vmul.f32 %v185, %v200
    %204 = vrot.lane.b32.xlu0 %v202, 32
    %v205 = vpop.permute.xlu0 %204
    %207 = vst.msk [vmem:[%s5] sm:$0xff] %vm62, %v205
    %s208 = scalar_lea.vmem [#allocation2], 8
    %v209 = vld [vmem:[%s208] sm:$0xff]
    %v210 = vsel %vm62, %v205, 0
    %212 = vmatpush.msra.mxu0 0.0
    %213 = vmatpush.msra.mxu0 0.0
    %214 = vmatpush.msra.mxu0 0.0
    %215 = vmatpush.msra.mxu0 0.0
    %216 = vmatpush.msra.mxu0 0.0
    %217 = vmatpush.msra.mxu0 0.0
    %218 = vmatpush.msra.mxu0 0.0
    %219 = vmatpush.msra.mxu0 0.0
    %220 = vmatpush.msra.mxu0 0.0
    %221 = vmatpush.msra.mxu0 0.0
    %222 = vmatpush.msra.mxu0 0.0
    %223 = vmatpush.msra.mxu0 0.0
    %224 = vmatpush.msra.mxu0 %v139
    %225 = vmatpush.msra.mxu0 %v138
    %226 = vmatpush.msra.mxu0 %v137
    %227 = vmatpush.msra.mxu0 %v136
    %228 = vmatmul.f32.gmra.mxu0 %v210
    %v229 = vpop.f32.mrf.mxu0
    %v230 = vadd.f32 0.0, %v229
    %231 = vdwg.mxu0
    %v232 = vadd.f32 %v209, %v230
    %v233 = vtanh.pop %v232
    %v234 = vxor.u32 %v232, 2147483648
    %v235 = vmul.f32 %v234, 1.442695
    %v236 = vpow.pop %v235
    %v237 = vadd.f32 %v236, 1.0
    %v238 = vrcp.pop %v237
    %v239 = vmul.f32 %v237, %v238
    %v240 = vsub.f32 1.0, %v239
    %v241 = vmul.f32 %v238, %v240
    %v242 = vadd.f32 %v238, %v241
    %vm243 = vweird.f32 %v237
    %vm244 = vweird.f32 %v238
    %vm245 = vmor %vm243, %vm244
    %v246 = vsel %vm245, %v238, %v242
    %v247 = vand.u32 2147483647, %v237
    %vm248 = vcmp.eq.f32.partialorder %v247, 8.507059e+37
    %v249 = vand.u32 %v237, 2147483648
    %v250 = vor.u32 1.1754944e-38, %v249
    %v251 = vsel %vm248, %v250, %v246
    %v252 = vmul.f32 1.0, %v251
    %v253 = vsel %vm45, %v233, %v252
    %v254 = vmul.f32 %v253, %v196
    %256 = vrot.lane.b32.xlu0 %v253, 64
    %v257 = vpop.permute.xlu0 %256
    %v259 = vmul.f32 %v253, %v257
    %261 = vrot.lane.b32.xlu0 %v259, 32
    %v262 = vpop.permute.xlu0 %261
    %v264 = vadd.f32 %v254, %v262
    %v265 = vtanh.pop %v264
    %267 = vrot.lane.b32.xlu0 %v265, 64
    %v268 = vpop.permute.xlu0 %267
    %v270 = vmul.f32 %v253, %v268
    %272 = vrot.lane.b32.xlu0 %v270, 32
    %v273 = vpop.permute.xlu0 %272
    %s275 = scalar_lea.vmem %s5, 8
    %276 = vst.msk [vmem:[%s275] sm:$0xff] %vm62, %v273
    %s277 = scalar_lea.vmem [#allocation2], 16
    %v278 = vld [vmem:[%s277] sm:$0xff]
    %v279 = vsel %vm62, %v273, 0
    %281 = vmatpush.msra.mxu0 0.0
    %282 = vmatpush.msra.mxu0 0.0
    %283 = vmatpush.msra.mxu0 0.0
    %284 = vmatpush.msra.mxu0 0.0
    %285 = vmatpush.msra.mxu0 0.0
    %286 = vmatpush.msra.mxu0 0.0
    %287 = vmatpush.msra.mxu0 0.0
    %288 = vmatpush.msra.mxu0 0.0
    %289 = vmatpush.msra.mxu0 0.0
    %290 = vmatpush.msra.mxu0 0.0
    %291 = vmatpush.msra.mxu0 0.0
    %292 = vmatpush.msra.mxu0 0.0
    %293 = vmatpush.msra.mxu0 %v139
    %294 = vmatpush.msra.mxu0 %v138
    %295 = vmatpush.msra.mxu0 %v137
    %296 = vmatpush.msra.mxu0 %v136
    %297 = vmatmul.f32.gmra.mxu0 %v279
    %v298 = vpop.f32.mrf.mxu0
    %v299 = vadd.f32 0.0, %v298
    %300 = vdwg.mxu0
    %v301 = vadd.f32 %v278, %v299
    %v302 = vtanh.pop %v301
    %v303 = vxor.u32 %v301, 2147483648
    %v304 = vmul.f32 %v303, 1.442695
    %v305 = vpow.pop %v304
    %v306 = vadd.f32 %v305, 1.0
    %v307 = vrcp.pop %v306
    %v308 = vmul.f32 %v306, %v307
    %v309 = vsub.f32 1.0, %v308
    %v310 = vmul.f32 %v307, %v309
    %v311 = vadd.f32 %v307, %v310
    %vm312 = vweird.f32 %v306
    %vm313 = vweird.f32 %v307
    %vm314 = vmor %vm312, %vm313
    %v315 = vsel %vm314, %v307, %v311
    %v316 = vand.u32 2147483647, %v306
    %vm317 = vcmp.eq.f32.partialorder %v316, 8.507059e+37
    %v318 = vand.u32 %v306, 2147483648
    %v319 = vor.u32 1.1754944e-38, %v318
    %v320 = vsel %vm317, %v319, %v315
    %v321 = vmul.f32 1.0, %v320
    %v322 = vsel %vm45, %v302, %v321
    %v323 = vmul.f32 %v322, %v264
    %325 = vrot.lane.b32.xlu0 %v322, 64
    %v326 = vpop.permute.xlu0 %325
    %v328 = vmul.f32 %v322, %v326
    %330 = vrot.lane.b32.xlu0 %v328, 32
    %v331 = vpop.permute.xlu0 %330
    %v333 = vadd.f32 %v323, %v331
    %v334 = vtanh.pop %v333
    %336 = vrot.lane.b32.xlu0 %v334, 64
    %v337 = vpop.permute.xlu0 %336
    %v339 = vmul.f32 %v322, %v337
    %341 = vrot.lane.b32.xlu0 %v339, 32
    %v342 = vpop.permute.xlu0 %341
    %s344 = scalar_lea.vmem %s5, 16
    %345 = vst.msk [vmem:[%s344] sm:$0xff] %vm62, %v342
    %s346 = scalar_lea.vmem [#allocation2], 24
    %v347 = vld [vmem:[%s346] sm:$0xff]
    %v348 = vsel %vm62, %v342, 0
    %350 = vmatpush.msra.mxu0 0.0
    %351 = vmatpush.msra.mxu0 0.0
    %352 = vmatpush.msra.mxu0 0.0
    %353 = vmatpush.msra.mxu0 0.0
    %354 = vmatpush.msra.mxu0 0.0
    %355 = vmatpush.msra.mxu0 0.0
    %356 = vmatpush.msra.mxu0 0.0
    %357 = vmatpush.msra.mxu0 0.0
    %358 = vmatpush.msra.mxu0 0.0
    %359 = vmatpush.msra.mxu0 0.0
    %360 = vmatpush.msra.mxu0 0.0
    %361 = vmatpush.msra.mxu0 0.0
    %362 = vmatpush.msra.mxu0 %v139
    %363 = vmatpush.msra.mxu0 %v138
    %364 = vmatpush.msra.mxu0 %v137
    %365 = vmatpush.msra.mxu0 %v136
    %366 = vmatmul.f32.gmra.mxu0 %v348
    %v367 = vpop.f32.mrf.mxu0
    %v368 = vadd.f32 0.0, %v367
    %369 = vdwg.mxu0
    %v370 = vadd.f32 %v347, %v368
    %v371 = vtanh.pop %v370
    %v372 = vxor.u32 %v370, 2147483648
    %v373 = vmul.f32 %v372, 1.442695
    %v374 = vpow.pop %v373
    %v375 = vadd.f32 %v374, 1.0
    %v376 = vrcp.pop %v375
    %v377 = vmul.f32 %v375, %v376
    %v378 = vsub.f32 1.0, %v377
    %v379 = vmul.f32 %v376, %v378
    %v380 = vadd.f32 %v376, %v379
    %vm381 = vweird.f32 %v375
    %vm382 = vweird.f32 %v376
    %vm383 = vmor %vm381, %vm382
    %v384 = vsel %vm383, %v376, %v380
    %v385 = vand.u32 2147483647, %v375
    %vm386 = vcmp.eq.f32.partialorder %v385, 8.507059e+37
    %v387 = vand.u32 %v375, 2147483648
    %v388 = vor.u32 1.1754944e-38, %v387
    %v389 = vsel %vm386, %v388, %v384
    %v390 = vmul.f32 1.0, %v389
    %v391 = vsel %vm45, %v371, %v390
    %v392 = vmul.f32 %v391, %v333
    %394 = vrot.lane.b32.xlu0 %v391, 64
    %v395 = vpop.permute.xlu0 %394
    %v397 = vmul.f32 %v391, %v395
    %399 = vrot.lane.b32.xlu0 %v397, 32
    %v400 = vpop.permute.xlu0 %399
    %v402 = vadd.f32 %v392, %v400
    %v403 = vtanh.pop %v402
    %405 = vrot.lane.b32.xlu0 %v403, 64
    %v406 = vpop.permute.xlu0 %405
    %v408 = vmul.f32 %v391, %v406
    %410 = vrot.lane.b32.xlu0 %v408, 32
    %v411 = vpop.permute.xlu0 %410
    %s413 = scalar_lea.vmem %s5, 24
    %414 = vst.msk [vmem:[%s413] sm:$0xff] %vm62, %v411
    %s415 = scalar_lea.vmem [#allocation2], 32
    %v416 = vld [vmem:[%s415] sm:$0xff]
    %v417 = vsel %vm62, %v411, 0
    %419 = vmatpush.msra.mxu0 0.0
    %420 = vmatpush.msra.mxu0 0.0
    %421 = vmatpush.msra.mxu0 0.0
    %422 = vmatpush.msra.mxu0 0.0
    %423 = vmatpush.msra.mxu0 0.0
    %424 = vmatpush.msra.mxu0 0.0
    %425 = vmatpush.msra.mxu0 0.0
    %426 = vmatpush.msra.mxu0 0.0
    %427 = vmatpush.msra.mxu0 0.0
    %428 = vmatpush.msra.mxu0 0.0
    %429 = vmatpush.msra.mxu0 0.0
    %430 = vmatpush.msra.mxu0 0.0
    %431 = vmatpush.msra.mxu0 %v139
    %432 = vmatpush.msra.mxu0 %v138
    %433 = vmatpush.msra.mxu0 %v137
    %434 = vmatpush.msra.mxu0 %v136
    %435 = vmatmul.f32.gmra.mxu0 %v417
    %v436 = vpop.f32.mrf.mxu0
    %v437 = vadd.f32 0.0, %v436
    %438 = vdwg.mxu0
    %v439 = vadd.f32 %v416, %v437
    %v440 = vtanh.pop %v439
    %v441 = vxor.u32 %v439, 2147483648
    %v442 = vmul.f32 %v441, 1.442695
    %v443 = vpow.pop %v442
    %v444 = vadd.f32 %v443, 1.0
    %v445 = vrcp.pop %v444
    %v446 = vmul.f32 %v444, %v445
    %v447 = vsub.f32 1.0, %v446
    %v448 = vmul.f32 %v445, %v447
    %v449 = vadd.f32 %v445, %v448
    %vm450 = vweird.f32 %v444
    %vm451 = vweird.f32 %v445
    %vm452 = vmor %vm450, %vm451
    %v453 = vsel %vm452, %v445, %v449
    %v454 = vand.u32 2147483647, %v444
    %vm455 = vcmp.eq.f32.partialorder %v454, 8.507059e+37
    %v456 = vand.u32 %v444, 2147483648
    %v457 = vor.u32 1.1754944e-38, %v456
    %v458 = vsel %vm455, %v457, %v453
    %v459 = vmul.f32 1.0, %v458
    %v460 = vsel %vm45, %v440, %v459
    %v461 = vmul.f32 %v460, %v402
    %463 = vrot.lane.b32.xlu0 %v460, 64
    %v464 = vpop.permute.xlu0 %463
    %v466 = vmul.f32 %v460, %v464
    %468 = vrot.lane.b32.xlu0 %v466, 32
    %v469 = vpop.permute.xlu0 %468
    %v471 = vadd.f32 %v461, %v469
    %v472 = vtanh.pop %v471
    %474 = vrot.lane.b32.xlu0 %v472, 64
    %v475 = vpop.permute.xlu0 %474
    %v477 = vmul.f32 %v460, %v475
    %479 = vrot.lane.b32.xlu0 %v477, 32
    %v480 = vpop.permute.xlu0 %479
    %s482 = scalar_lea.vmem %s5, 32
    %483 = vst.msk [vmem:[%s482] sm:$0xff] %vm62, %v480
    %s484 = scalar_lea.vmem [#allocation2], 40
    %v485 = vld [vmem:[%s484] sm:$0xff]
    %v486 = vsel %vm62, %v480, 0
    %488 = vmatpush.msra.mxu0 0.0
    %489 = vmatpush.msra.mxu0 0.0
    %490 = vmatpush.msra.mxu0 0.0
    %491 = vmatpush.msra.mxu0 0.0
    %492 = vmatpush.msra.mxu0 0.0
    %493 = vmatpush.msra.mxu0 0.0
    %494 = vmatpush.msra.mxu0 0.0
    %495 = vmatpush.msra.mxu0 0.0
    %496 = vmatpush.msra.mxu0 0.0
    %497 = vmatpush.msra.mxu0 0.0
    %498 = vmatpush.msra.mxu0 0.0
    %499 = vmatpush.msra.mxu0 0.0
    %500 = vmatpush.msra.mxu0 %v139
    %501 = vmatpush.msra.mxu0 %v138
    %502 = vmatpush.msra.mxu0 %v137
    %503 = vmatpush.msra.mxu0 %v136
    %504 = vmatmul.f32.gmra.mxu0 %v486
    %v505 = vpop.f32.mrf.mxu0
    %v506 = vadd.f32 0.0, %v505
    %507 = vdwg.mxu0
    %v508 = vadd.f32 %v485, %v506
    %v509 = vtanh.pop %v508
    %v510 = vxor.u32 %v508, 2147483648
    %v511 = vmul.f32 %v510, 1.442695
    %v512 = vpow.pop %v511
    %v513 = vadd.f32 %v512, 1.0
    %v514 = vrcp.pop %v513
    %v515 = vmul.f32 %v513, %v514
    %v516 = vsub.f32 1.0, %v515
    %v517 = vmul.f32 %v514, %v516
    %v518 = vadd.f32 %v514, %v517
    %vm519 = vweird.f32 %v513
    %vm520 = vweird.f32 %v514
    %vm521 = vmor %vm519, %vm520
    %v522 = vsel %vm521, %v514, %v518
    %v523 = vand.u32 2147483647, %v513
    %vm524 = vcmp.eq.f32.partialorder %v523, 8.507059e+37
    %v525 = vand.u32 %v513, 2147483648
    %v526 = vor.u32 1.1754944e-38, %v525
    %v527 = vsel %vm524, %v526, %v522
    %v528 = vmul.f32 1.0, %v527
    %v529 = vsel %vm45, %v509, %v528
    %v530 = vmul.f32 %v529, %v471
    %532 = vrot.lane.b32.xlu0 %v529, 64
    %v533 = vpop.permute.xlu0 %532
    %v535 = vmul.f32 %v529, %v533
    %537 = vrot.lane.b32.xlu0 %v535, 32
    %v538 = vpop.permute.xlu0 %537
    %v540 = vadd.f32 %v530, %v538
    %v541 = vtanh.pop %v540
    %543 = vrot.lane.b32.xlu0 %v541, 64
    %v544 = vpop.permute.xlu0 %543
    %v546 = vmul.f32 %v529, %v544
    %548 = vrot.lane.b32.xlu0 %v546, 32
    %v549 = vpop.permute.xlu0 %548
    %s551 = scalar_lea.vmem %s5, 40
    %552 = vst.msk [vmem:[%s551] sm:$0xff] %vm62, %v549
    %s553 = scalar_lea.vmem [#allocation2], 48
    %v554 = vld [vmem:[%s553] sm:$0xff]
    %v555 = vsel %vm62, %v549, 0
    %557 = vmatpush.msra.mxu0 0.0
    %558 = vmatpush.msra.mxu0 0.0
    %559 = vmatpush.msra.mxu0 0.0
    %560 = vmatpush.msra.mxu0 0.0
    %561 = vmatpush.msra.mxu0 0.0
    %562 = vmatpush.msra.mxu0 0.0
    %563 = vmatpush.msra.mxu0 0.0
    %564 = vmatpush.msra.mxu0 0.0
    %565 = vmatpush.msra.mxu0 0.0
    %566 = vmatpush.msra.mxu0 0.0
    %567 = vmatpush.msra.mxu0 0.0
    %568 = vmatpush.msra.mxu0 0.0
    %569 = vmatpush.msra.mxu0 %v139
    %570 = vmatpush.msra.mxu0 %v138
    %571 = vmatpush.msra.mxu0 %v137
    %572 = vmatpush.msra.mxu0 %v136
    %573 = vmatmul.f32.gmra.mxu0 %v555
    %v574 = vpop.f32.mrf.mxu0
    %v575 = vadd.f32 0.0, %v574
    %576 = vdwg.mxu0
    %v577 = vadd.f32 %v554, %v575
    %v578 = vtanh.pop %v577
    %v579 = vxor.u32 %v577, 2147483648
    %v580 = vmul.f32 %v579, 1.442695
    %v581 = vpow.pop %v580
    %v582 = vadd.f32 %v581, 1.0
    %v583 = vrcp.pop %v582
    %v584 = vmul.f32 %v582, %v583
    %v585 = vsub.f32 1.0, %v584
    %v586 = vmul.f32 %v583, %v585
    %v587 = vadd.f32 %v583, %v586
    %vm588 = vweird.f32 %v582
    %vm589 = vweird.f32 %v583
    %vm590 = vmor %vm588, %vm589
    %v591 = vsel %vm590, %v583, %v587
    %v592 = vand.u32 2147483647, %v582
    %vm593 = vcmp.eq.f32.partialorder %v592, 8.507059e+37
    %v594 = vand.u32 %v582, 2147483648
    %v595 = vor.u32 1.1754944e-38, %v594
    %v596 = vsel %vm593, %v595, %v591
    %v597 = vmul.f32 1.0, %v596
    %v598 = vsel %vm45, %v578, %v597
    %v599 = vmul.f32 %v598, %v540
    %601 = vrot.lane.b32.xlu0 %v598, 64
    %v602 = vpop.permute.xlu0 %601
    %v604 = vmul.f32 %v598, %v602
    %606 = vrot.lane.b32.xlu0 %v604, 32
    %v607 = vpop.permute.xlu0 %606
    %v609 = vadd.f32 %v599, %v607
    %v610 = vtanh.pop %v609
    %612 = vrot.lane.b32.xlu0 %v610, 64
    %v613 = vpop.permute.xlu0 %612
    %v615 = vmul.f32 %v598, %v613
    %617 = vrot.lane.b32.xlu0 %v615, 32
    %v618 = vpop.permute.xlu0 %617
    %s620 = scalar_lea.vmem %s5, 48
    %621 = vst.msk [vmem:[%s620] sm:$0xff] %vm62, %v618
    %s622 = scalar_lea.vmem [#allocation2], 56
    %v623 = vld [vmem:[%s622] sm:$0xff]
    %v624 = vsel %vm62, %v618, 0
    %626 = vmatpush.msra.mxu0 0.0
    %627 = vmatpush.msra.mxu0 0.0
    %628 = vmatpush.msra.mxu0 0.0
    %629 = vmatpush.msra.mxu0 0.0
    %630 = vmatpush.msra.mxu0 0.0
    %631 = vmatpush.msra.mxu0 0.0
    %632 = vmatpush.msra.mxu0 0.0
    %633 = vmatpush.msra.mxu0 0.0
    %634 = vmatpush.msra.mxu0 0.0
    %635 = vmatpush.msra.mxu0 0.0
    %636 = vmatpush.msra.mxu0 0.0
    %637 = vmatpush.msra.mxu0 0.0
    %638 = vmatpush.msra.mxu0 %v139
    %639 = vmatpush.msra.mxu0 %v138
    %640 = vmatpush.msra.mxu0 %v137
    %641 = vmatpush.msra.mxu0 %v136
    %642 = vmatmul.f32.gmra.mxu0 %v624
    %v643 = vpop.f32.mrf.mxu0
    %v644 = vadd.f32 0.0, %v643
    %645 = vdwg.mxu0
    %v646 = vadd.f32 %v623, %v644
    %v647 = vtanh.pop %v646
    %v648 = vxor.u32 %v646, 2147483648
    %v649 = vmul.f32 %v648, 1.442695
    %v650 = vpow.pop %v649
    %v651 = vadd.f32 %v650, 1.0
    %v652 = vrcp.pop %v651
    %v653 = vmul.f32 %v651, %v652
    %v654 = vsub.f32 1.0, %v653
    %v655 = vmul.f32 %v652, %v654
    %v656 = vadd.f32 %v652, %v655
    %vm657 = vweird.f32 %v651
    %vm658 = vweird.f32 %v652
    %vm659 = vmor %vm657, %vm658
    %v660 = vsel %vm659, %v652, %v656
    %v661 = vand.u32 2147483647, %v651
    %vm662 = vcmp.eq.f32.partialorder %v661, 8.507059e+37
    %v663 = vand.u32 %v651, 2147483648
    %v664 = vor.u32 1.1754944e-38, %v663
    %v665 = vsel %vm662, %v664, %v660
    %v666 = vmul.f32 1.0, %v665
    %v667 = vsel %vm45, %v647, %v666
    %v668 = vmul.f32 %v667, %v609
    %670 = vrot.lane.b32.xlu0 %v667, 64
    %v671 = vpop.permute.xlu0 %670
    %v673 = vmul.f32 %v667, %v671
    %675 = vrot.lane.b32.xlu0 %v673, 32
    %v676 = vpop.permute.xlu0 %675
    %v678 = vadd.f32 %v668, %v676
    %v679 = vtanh.pop %v678
    %681 = vrot.lane.b32.xlu0 %v679, 64
    %v682 = vpop.permute.xlu0 %681
    %v684 = vmul.f32 %v667, %v682
    %686 = vrot.lane.b32.xlu0 %v684, 32
    %v687 = vpop.permute.xlu0 %686
    %s689 = scalar_lea.vmem %s5, 56
    %690 = vst.msk [vmem:[%s689] sm:$0xff] %vm62, %v687
    %691 = vst.msk [vmem:[#allocation6] sm:$0xff] %vm62, %v687
    %693 = vrot.lane.b32.xlu0 %v678, 96
    %v694 = vpop.permute.xlu0 %693
    %696 = vst.msk [vmem:[#allocation7] sm:$0xff] %vm62, %v694
    %v697 = vld [vmem:[%s5] sm:$0xff]
    %v698 = vld [vmem:[%s5 + $0x8] sm:$0xff]
    %v699 = vld [vmem:[%s5 + $0x10] sm:$0xff]
    %v700 = vld [vmem:[%s5 + $0x18] sm:$0xff]
    %v701 = vld [vmem:[%s5 + $0x20] sm:$0xff]
    %v702 = vld [vmem:[%s5 + $0x28] sm:$0xff]
    %v703 = vld [vmem:[%s5 + $0x30] sm:$0xff]
    %v704 = vld [vmem:[%s5 + $0x38] sm:$0xff]
    %s705 = scalar_lea.vmem %s2, 32
    %v706 = vld [vmem:[%s705] sm:$0xff]
    %v707 = vld [vmem:[%s705 + $0x8] sm:$0xff]
    %v708 = vld [vmem:[%s705 + $0x10] sm:$0xff]
    %v709 = vld [vmem:[%s705 + $0x18] sm:$0xff]
    %s710 = scalar_lea.vmem %s4, 1
    %v711 = vld [vmem:[%s710] sm:$0x1]
    %v713 = vperm.slane %v711, 0
    %v716 = vsel %vm62, %v697, 0
    %v719 = vsel %vm62, %v698, 0
    %v722 = vsel %vm62, %v699, 0
    %v725 = vsel %vm62, %v700, 0
    %v728 = vsel %vm62, %v701, 0
    %v731 = vsel %vm62, %v702, 0
    %v734 = vsel %vm62, %v703, 0
    %v737 = vsel %vm62, %v704, 0
    %739 = vmatpush.msra.mxu0 0.0
    %740 = vmatpush.msra.mxu0 0.0
    %741 = vmatpush.msra.mxu0 0.0
    %742 = vmatpush.msra.mxu0 0.0
    %743 = vmatpush.msra.mxu0 0.0
    %744 = vmatpush.msra.mxu0 0.0
    %745 = vmatpush.msra.mxu0 0.0
    %746 = vmatpush.msra.mxu0 0.0
    %747 = vmatpush.msra.mxu0 0.0
    %748 = vmatpush.msra.mxu0 0.0
    %749 = vmatpush.msra.mxu0 0.0
    %750 = vmatpush.msra.mxu0 0.0
    %751 = vmatpush.msra.mxu0 %v709
    %752 = vmatpush.msra.mxu0 %v708
    %753 = vmatpush.msra.mxu0 %v707
    %754 = vmatpush.msra.mxu0 %v706
    %755 = vmatmul.f32.gmra.mxu0 %v716
    %v756 = vpop.f32.mrf.mxu0
    %v757 = vadd.f32 %v713, %v756
    %758 = vmatmul.f32.gmra.mxu0 %v719
    %v759 = vpop.f32.mrf.mxu0
    %v760 = vadd.f32 %v713, %v759
    %761 = vmatmul.f32.gmra.mxu0 %v722
    %v762 = vpop.f32.mrf.mxu0
    %v763 = vadd.f32 %v713, %v762
    %764 = vmatmul.f32.gmra.mxu0 %v725
    %v765 = vpop.f32.mrf.mxu0
    %v766 = vadd.f32 %v713, %v765
    %767 = vmatmul.f32.gmra.mxu0 %v728
    %v768 = vpop.f32.mrf.mxu0
    %v769 = vadd.f32 %v713, %v768
    %770 = vmatmul.f32.gmra.mxu0 %v731
    %v771 = vpop.f32.mrf.mxu0
    %v772 = vadd.f32 %v713, %v771
    %773 = vmatmul.f32.gmra.mxu0 %v734
    %v774 = vpop.f32.mrf.mxu0
    %v775 = vadd.f32 %v713, %v774
    %776 = vmatmul.f32.gmra.mxu0 %v737
    %v777 = vpop.f32.mrf.mxu0
    %v778 = vadd.f32 %v713, %v777
    %779 = vdwg.mxu0
    %780 = vst [vmem:[#allocation2] sm:$0xff] %v757
    %781 = vst [vmem:[#allocation2 + $0x8] sm:$0xff] %v760
    %782 = vst [vmem:[#allocation2 + $0x10] sm:$0xff] %v763
    %783 = vst [vmem:[#allocation2 + $0x18] sm:$0xff] %v766
    %784 = vst [vmem:[#allocation2 + $0x20] sm:$0xff] %v769
    %785 = vst [vmem:[#allocation2 + $0x28] sm:$0xff] %v772
    %786 = vst [vmem:[#allocation2 + $0x30] sm:$0xff] %v775
    %787 = vst [vmem:[#allocation2 + $0x38] sm:$0xff] %v778
    %s788 = scalar_lea.vmem [#allocation3], 32
    %v789 = vld [vmem:[%s788] sm:$0xff]
    %v790 = vld [vmem:[%s788 + $0x8] sm:$0xff]
    %v791 = vld [vmem:[%s788 + $0x10] sm:$0xff]
    %v792 = vld [vmem:[%s788 + $0x18] sm:$0xff]
    %v793 = vld [vmem:[#allocation2] sm:$0xff]
    %794 = vmatpush.msra.mxu0 0.0
    %795 = vmatpush.msra.mxu0 0.0
    %796 = vmatpush.msra.mxu0 0.0
    %797 = vmatpush.msra.mxu0 0.0
    %798 = vmatpush.msra.mxu0 0.0
    %799 = vmatpush.msra.mxu0 0.0
    %800 = vmatpush.msra.mxu0 0.0
    %801 = vmatpush.msra.mxu0 0.0
    %802 = vmatpush.msra.mxu0 0.0
    %803 = vmatpush.msra.mxu0 0.0
    %804 = vmatpush.msra.mxu0 0.0
    %805 = vmatpush.msra.mxu0 0.0
    %806 = vmatpush.msra.mxu0 %v792
    %807 = vmatpush.msra.mxu0 %v791
    %808 = vmatpush.msra.mxu0 %v790
    %809 = vmatpush.msra.mxu0 %v789
    %810 = vmatmul.f32.gmra.mxu0 %v142
    %v811 = vpop.f32.mrf.mxu0
    %v812 = vadd.f32 0.0, %v811
    %813 = vdwg.mxu0
    %v814 = vadd.f32 %v793, %v812
    %v815 = vtanh.pop %v814
    %v816 = vxor.u32 %v814, 2147483648
    %v817 = vmul.f32 %v816, 1.442695
    %v818 = vpow.pop %v817
    %v819 = vadd.f32 %v818, 1.0
    %v820 = vrcp.pop %v819
    %v821 = vmul.f32 %v819, %v820
    %v822 = vsub.f32 1.0, %v821
    %v823 = vmul.f32 %v820, %v822
    %v824 = vadd.f32 %v820, %v823
    %vm825 = vweird.f32 %v819
    %vm826 = vweird.f32 %v820
    %vm827 = vmor %vm825, %vm826
    %v828 = vsel %vm827, %v820, %v824
    %v829 = vand.u32 2147483647, %v819
    %vm830 = vcmp.eq.f32.partialorder %v829, 8.507059e+37
    %v831 = vand.u32 %v819, 2147483648
    %v832 = vor.u32 1.1754944e-38, %v831
    %v833 = vsel %vm830, %v832, %v828
    %v834 = vmul.f32 1.0, %v833
    %v835 = vsel %vm45, %v815, %v834
    %v836 = vmul.f32 %v835, 0.0
    %838 = vrot.lane.b32.xlu0 %v835, 64
    %v839 = vpop.permute.xlu0 %838
    %v841 = vmul.f32 %v835, %v839
    %843 = vrot.lane.b32.xlu0 %v841, 32
    %v844 = vpop.permute.xlu0 %843
    %v846 = vadd.f32 %v836, %v844
    %v847 = vtanh.pop %v846
    %849 = vrot.lane.b32.xlu0 %v847, 64
    %v850 = vpop.permute.xlu0 %849
    %v852 = vmul.f32 %v835, %v850
    %854 = vrot.lane.b32.xlu0 %v852, 32
    %v855 = vpop.permute.xlu0 %854
    %857 = vst.msk [vmem:[%s5] sm:$0xff] %vm62, %v855
    %v858 = vld [vmem:[%s208] sm:$0xff]
    %v859 = vsel %vm62, %v855, 0
    %861 = vmatpush.msra.mxu0 0.0
    %862 = vmatpush.msra.mxu0 0.0
    %863 = vmatpush.msra.mxu0 0.0
    %864 = vmatpush.msra.mxu0 0.0
    %865 = vmatpush.msra.mxu0 0.0
    %866 = vmatpush.msra.mxu0 0.0
    %867 = vmatpush.msra.mxu0 0.0
    %868 = vmatpush.msra.mxu0 0.0
    %869 = vmatpush.msra.mxu0 0.0
    %870 = vmatpush.msra.mxu0 0.0
    %871 = vmatpush.msra.mxu0 0.0
    %872 = vmatpush.msra.mxu0 0.0
    %873 = vmatpush.msra.mxu0 %v792
    %874 = vmatpush.msra.mxu0 %v791
    %875 = vmatpush.msra.mxu0 %v790
    %876 = vmatpush.msra.mxu0 %v789
    %877 = vmatmul.f32.gmra.mxu0 %v859
    %v878 = vpop.f32.mrf.mxu0
    %v879 = vadd.f32 0.0, %v878
    %880 = vdwg.mxu0
    %v881 = vadd.f32 %v858, %v879
    %v882 = vtanh.pop %v881
    %v883 = vxor.u32 %v881, 2147483648
    %v884 = vmul.f32 %v883, 1.442695
    %v885 = vpow.pop %v884
    %v886 = vadd.f32 %v885, 1.0
    %v887 = vrcp.pop %v886
    %v888 = vmul.f32 %v886, %v887
    %v889 = vsub.f32 1.0, %v888
    %v890 = vmul.f32 %v887, %v889
    %v891 = vadd.f32 %v887, %v890
    %vm892 = vweird.f32 %v886
    %vm893 = vweird.f32 %v887
    %vm894 = vmor %vm892, %vm893
    %v895 = vsel %vm894, %v887, %v891
    %v896 = vand.u32 2147483647, %v886
    %vm897 = vcmp.eq.f32.partialorder %v896, 8.507059e+37
    %v898 = vand.u32 %v886, 2147483648
    %v899 = vor.u32 1.1754944e-38, %v898
    %v900 = vsel %vm897, %v899, %v895
    %v901 = vmul.f32 1.0, %v900
    %v902 = vsel %vm45, %v882, %v901
    %v903 = vmul.f32 %v902, %v846
    %905 = vrot.lane.b32.xlu0 %v902, 64
    %v906 = vpop.permute.xlu0 %905
    %v908 = vmul.f32 %v902, %v906
    %910 = vrot.lane.b32.xlu0 %v908, 32
    %v911 = vpop.permute.xlu0 %910
    %v913 = vadd.f32 %v903, %v911
    %v914 = vtanh.pop %v913
    %916 = vrot.lane.b32.xlu0 %v914, 64
    %v917 = vpop.permute.xlu0 %916
    %v919 = vmul.f32 %v902, %v917
    %921 = vrot.lane.b32.xlu0 %v919, 32
    %v922 = vpop.permute.xlu0 %921
    %924 = vst.msk [vmem:[%s275] sm:$0xff] %vm62, %v922
    %v925 = vld [vmem:[%s277] sm:$0xff]
    %v926 = vsel %vm62, %v922, 0
    %928 = vmatpush.msra.mxu0 0.0
    %929 = vmatpush.msra.mxu0 0.0
    %930 = vmatpush.msra.mxu0 0.0
    %931 = vmatpush.msra.mxu0 0.0
    %932 = vmatpush.msra.mxu0 0.0
    %933 = vmatpush.msra.mxu0 0.0
    %934 = vmatpush.msra.mxu0 0.0
    %935 = vmatpush.msra.mxu0 0.0
    %936 = vmatpush.msra.mxu0 0.0
    %937 = vmatpush.msra.mxu0 0.0
    %938 = vmatpush.msra.mxu0 0.0
    %939 = vmatpush.msra.mxu0 0.0
    %940 = vmatpush.msra.mxu0 %v792
    %941 = vmatpush.msra.mxu0 %v791
    %942 = vmatpush.msra.mxu0 %v790
    %943 = vmatpush.msra.mxu0 %v789
    %944 = vmatmul.f32.gmra.mxu0 %v926
    %v945 = vpop.f32.mrf.mxu0
    %v946 = vadd.f32 0.0, %v945
    %947 = vdwg.mxu0
    %v948 = vadd.f32 %v925, %v946
    %v949 = vtanh.pop %v948
    %v950 = vxor.u32 %v948, 2147483648
    %v951 = vmul.f32 %v950, 1.442695
    %v952 = vpow.pop %v951
    %v953 = vadd.f32 %v952, 1.0
    %v954 = vrcp.pop %v953
    %v955 = vmul.f32 %v953, %v954
    %v956 = vsub.f32 1.0, %v955
    %v957 = vmul.f32 %v954, %v956
    %v958 = vadd.f32 %v954, %v957
    %vm959 = vweird.f32 %v953
    %vm960 = vweird.f32 %v954
    %vm961 = vmor %vm959, %vm960
    %v962 = vsel %vm961, %v954, %v958
    %v963 = vand.u32 2147483647, %v953
    %vm964 = vcmp.eq.f32.partialorder %v963, 8.507059e+37
    %v965 = vand.u32 %v953, 2147483648
    %v966 = vor.u32 1.1754944e-38, %v965
    %v967 = vsel %vm964, %v966, %v962
    %v968 = vmul.f32 1.0, %v967
    %v969 = vsel %vm45, %v949, %v968
    %v970 = vmul.f32 %v969, %v913
    %972 = vrot.lane.b32.xlu0 %v969, 64
    %v973 = vpop.permute.xlu0 %972
    %v975 = vmul.f32 %v969, %v973
    %977 = vrot.lane.b32.xlu0 %v975, 32
    %v978 = vpop.permute.xlu0 %977
    %v980 = vadd.f32 %v970, %v978
    %v981 = vtanh.pop %v980
    %983 = vrot.lane.b32.xlu0 %v981, 64
    %v984 = vpop.permute.xlu0 %983
    %v986 = vmul.f32 %v969, %v984
    %988 = vrot.lane.b32.xlu0 %v986, 32
    %v989 = vpop.permute.xlu0 %988
    %991 = vst.msk [vmem:[%s344] sm:$0xff] %vm62, %v989
    %v992 = vld [vmem:[%s346] sm:$0xff]
    %v993 = vsel %vm62, %v989, 0
    %995 = vmatpush.msra.mxu0 0.0
    %996 = vmatpush.msra.mxu0 0.0
    %997 = vmatpush.msra.mxu0 0.0
    %998 = vmatpush.msra.mxu0 0.0
    %999 = vmatpush.msra.mxu0 0.0
    %1000 = vmatpush.msra.mxu0 0.0
    %1001 = vmatpush.msra.mxu0 0.0
    %1002 = vmatpush.msra.mxu0 0.0
    %1003 = vmatpush.msra.mxu0 0.0
    %1004 = vmatpush.msra.mxu0 0.0
    %1005 = vmatpush.msra.mxu0 0.0
    %1006 = vmatpush.msra.mxu0 0.0
    %1007 = vmatpush.msra.mxu0 %v792
    %1008 = vmatpush.msra.mxu0 %v791
    %1009 = vmatpush.msra.mxu0 %v790
    %1010 = vmatpush.msra.mxu0 %v789
    %1011 = vmatmul.f32.gmra.mxu0 %v993
    %v1012 = vpop.f32.mrf.mxu0
    %v1013 = vadd.f32 0.0, %v1012
    %1014 = vdwg.mxu0
    %v1015 = vadd.f32 %v992, %v1013
    %v1016 = vtanh.pop %v1015
    %v1017 = vxor.u32 %v1015, 2147483648
    %v1018 = vmul.f32 %v1017, 1.442695
    %v1019 = vpow.pop %v1018
    %v1020 = vadd.f32 %v1019, 1.0
    %v1021 = vrcp.pop %v1020
    %v1022 = vmul.f32 %v1020, %v1021
    %v1023 = vsub.f32 1.0, %v1022
    %v1024 = vmul.f32 %v1021, %v1023
    %v1025 = vadd.f32 %v1021, %v1024
    %vm1026 = vweird.f32 %v1020
    %vm1027 = vweird.f32 %v1021
    %vm1028 = vmor %vm1026, %vm1027
    %v1029 = vsel %vm1028, %v1021, %v1025
    %v1030 = vand.u32 2147483647, %v1020
    %vm1031 = vcmp.eq.f32.partialorder %v1030, 8.507059e+37
    %v1032 = vand.u32 %v1020, 2147483648
    %v1033 = vor.u32 1.1754944e-38, %v1032
    %v1034 = vsel %vm1031, %v1033, %v1029
    %v1035 = vmul.f32 1.0, %v1034
    %v1036 = vsel %vm45, %v1016, %v1035
    %v1037 = vmul.f32 %v1036, %v980
    %1039 = vrot.lane.b32.xlu0 %v1036, 64
    %v1040 = vpop.permute.xlu0 %1039
    %v1042 = vmul.f32 %v1036, %v1040
    %1044 = vrot.lane.b32.xlu0 %v1042, 32
    %v1045 = vpop.permute.xlu0 %1044
    %v1047 = vadd.f32 %v1037, %v1045
    %v1048 = vtanh.pop %v1047
    %1050 = vrot.lane.b32.xlu0 %v1048, 64
    %v1051 = vpop.permute.xlu0 %1050
    %v1053 = vmul.f32 %v1036, %v1051
    %1055 = vrot.lane.b32.xlu0 %v1053, 32
    %v1056 = vpop.permute.xlu0 %1055
    %1058 = vst.msk [vmem:[%s413] sm:$0xff] %vm62, %v1056
    %v1059 = vld [vmem:[%s415] sm:$0xff]
    %v1060 = vsel %vm62, %v1056, 0
    %1062 = vmatpush.msra.mxu0 0.0
    %1063 = vmatpush.msra.mxu0 0.0
    %1064 = vmatpush.msra.mxu0 0.0
    %1065 = vmatpush.msra.mxu0 0.0
    %1066 = vmatpush.msra.mxu0 0.0
    %1067 = vmatpush.msra.mxu0 0.0
    %1068 = vmatpush.msra.mxu0 0.0
    %1069 = vmatpush.msra.mxu0 0.0
    %1070 = vmatpush.msra.mxu0 0.0
    %1071 = vmatpush.msra.mxu0 0.0
    %1072 = vmatpush.msra.mxu0 0.0
    %1073 = vmatpush.msra.mxu0 0.0
    %1074 = vmatpush.msra.mxu0 %v792
    %1075 = vmatpush.msra.mxu0 %v791
    %1076 = vmatpush.msra.mxu0 %v790
    %1077 = vmatpush.msra.mxu0 %v789
    %1078 = vmatmul.f32.gmra.mxu0 %v1060
    %v1079 = vpop.f32.mrf.mxu0
    %v1080 = vadd.f32 0.0, %v1079
    %1081 = vdwg.mxu0
    %v1082 = vadd.f32 %v1059, %v1080
    %v1083 = vtanh.pop %v1082
    %v1084 = vxor.u32 %v1082, 2147483648
    %v1085 = vmul.f32 %v1084, 1.442695
    %v1086 = vpow.pop %v1085
    %v1087 = vadd.f32 %v1086, 1.0
    %v1088 = vrcp.pop %v1087
    %v1089 = vmul.f32 %v1087, %v1088
    %v1090 = vsub.f32 1.0, %v1089
    %v1091 = vmul.f32 %v1088, %v1090
    %v1092 = vadd.f32 %v1088, %v1091
    %vm1093 = vweird.f32 %v1087
    %vm1094 = vweird.f32 %v1088
    %vm1095 = vmor %vm1093, %vm1094
    %v1096 = vsel %vm1095, %v1088, %v1092
    %v1097 = vand.u32 2147483647, %v1087
    %vm1098 = vcmp.eq.f32.partialorder %v1097, 8.507059e+37
    %v1099 = vand.u32 %v1087, 2147483648
    %v1100 = vor.u32 1.1754944e-38, %v1099
    %v1101 = vsel %vm1098, %v1100, %v1096
    %v1102 = vmul.f32 1.0, %v1101
    %v1103 = vsel %vm45, %v1083, %v1102
    %v1104 = vmul.f32 %v1103, %v1047
    %1106 = vrot.lane.b32.xlu0 %v1103, 64
    %v1107 = vpop.permute.xlu0 %1106
    %v1109 = vmul.f32 %v1103, %v1107
    %1111 = vrot.lane.b32.xlu0 %v1109, 32
    %v1112 = vpop.permute.xlu0 %1111
    %v1114 = vadd.f32 %v1104, %v1112
    %v1115 = vtanh.pop %v1114
    %1117 = vrot.lane.b32.xlu0 %v1115, 64
    %v1118 = vpop.permute.xlu0 %1117
    %v1120 = vmul.f32 %v1103, %v1118
    %1122 = vrot.lane.b32.xlu0 %v1120, 32
    %v1123 = vpop.permute.xlu0 %1122
    %1125 = vst.msk [vmem:[%s482] sm:$0xff] %vm62, %v1123
    %v1126 = vld [vmem:[%s484] sm:$0xff]
    %v1127 = vsel %vm62, %v1123, 0
    %1129 = vmatpush.msra.mxu0 0.0
    %1130 = vmatpush.msra.mxu0 0.0
    %1131 = vmatpush.msra.mxu0 0.0
    %1132 = vmatpush.msra.mxu0 0.0
    %1133 = vmatpush.msra.mxu0 0.0
    %1134 = vmatpush.msra.mxu0 0.0
    %1135 = vmatpush.msra.mxu0 0.0
    %1136 = vmatpush.msra.mxu0 0.0
    %1137 = vmatpush.msra.mxu0 0.0
    %1138 = vmatpush.msra.mxu0 0.0
    %1139 = vmatpush.msra.mxu0 0.0
    %1140 = vmatpush.msra.mxu0 0.0
    %1141 = vmatpush.msra.mxu0 %v792
    %1142 = vmatpush.msra.mxu0 %v791
    %1143 = vmatpush.msra.mxu0 %v790
    %1144 = vmatpush.msra.mxu0 %v789
    %1145 = vmatmul.f32.gmra.mxu0 %v1127
    %v1146 = vpop.f32.mrf.mxu0
    %v1147 = vadd.f32 0.0, %v1146
    %1148 = vdwg.mxu0
    %v1149 = vadd.f32 %v1126, %v1147
    %v1150 = vtanh.pop %v1149
    %v1151 = vxor.u32 %v1149, 2147483648
    %v1152 = vmul.f32 %v1151, 1.442695
    %v1153 = vpow.pop %v1152
    %v1154 = vadd.f32 %v1153, 1.0
    %v1155 = vrcp.pop %v1154
    %v1156 = vmul.f32 %v1154, %v1155
    %v1157 = vsub.f32 1.0, %v1156
    %v1158 = vmul.f32 %v1155, %v1157
    %v1159 = vadd.f32 %v1155, %v1158
    %vm1160 = vweird.f32 %v1154
    %vm1161 = vweird.f32 %v1155
    %vm1162 = vmor %vm1160, %vm1161
    %v1163 = vsel %vm1162, %v1155, %v1159
    %v1164 = vand.u32 2147483647, %v1154
    %vm1165 = vcmp.eq.f32.partialorder %v1164, 8.507059e+37
    %v1166 = vand.u32 %v1154, 2147483648
    %v1167 = vor.u32 1.1754944e-38, %v1166
    %v1168 = vsel %vm1165, %v1167, %v1163
    %v1169 = vmul.f32 1.0, %v1168
    %v1170 = vsel %vm45, %v1150, %v1169
    %v1171 = vmul.f32 %v1170, %v1114
    %1173 = vrot.lane.b32.xlu0 %v1170, 64
    %v1174 = vpop.permute.xlu0 %1173
    %v1176 = vmul.f32 %v1170, %v1174
    %1178 = vrot.lane.b32.xlu0 %v1176, 32
    %v1179 = vpop.permute.xlu0 %1178
    %v1181 = vadd.f32 %v1171, %v1179
    %v1182 = vtanh.pop %v1181
    %1184 = vrot.lane.b32.xlu0 %v1182, 64
    %v1185 = vpop.permute.xlu0 %1184
    %v1187 = vmul.f32 %v1170, %v1185
    %1189 = vrot.lane.b32.xlu0 %v1187, 32
    %v1190 = vpop.permute.xlu0 %1189
    %1192 = vst.msk [vmem:[%s551] sm:$0xff] %vm62, %v1190
    %v1193 = vld [vmem:[%s553] sm:$0xff]
    %v1194 = vsel %vm62, %v1190, 0
    %1196 = vmatpush.msra.mxu0 0.0
    %1197 = vmatpush.msra.mxu0 0.0
    %1198 = vmatpush.msra.mxu0 0.0
    %1199 = vmatpush.msra.mxu0 0.0
    %1200 = vmatpush.msra.mxu0 0.0
    %1201 = vmatpush.msra.mxu0 0.0
    %1202 = vmatpush.msra.mxu0 0.0
    %1203 = vmatpush.msra.mxu0 0.0
    %1204 = vmatpush.msra.mxu0 0.0
    %1205 = vmatpush.msra.mxu0 0.0
    %1206 = vmatpush.msra.mxu0 0.0
    %1207 = vmatpush.msra.mxu0 0.0
    %1208 = vmatpush.msra.mxu0 %v792
    %1209 = vmatpush.msra.mxu0 %v791
    %1210 = vmatpush.msra.mxu0 %v790
    %1211 = vmatpush.msra.mxu0 %v789
    %1212 = vmatmul.f32.gmra.mxu0 %v1194
    %v1213 = vpop.f32.mrf.mxu0
    %v1214 = vadd.f32 0.0, %v1213
    %1215 = vdwg.mxu0
    %v1216 = vadd.f32 %v1193, %v1214
    %v1217 = vtanh.pop %v1216
    %v1218 = vxor.u32 %v1216, 2147483648
    %v1219 = vmul.f32 %v1218, 1.442695
    %v1220 = vpow.pop %v1219
    %v1221 = vadd.f32 %v1220, 1.0
    %v1222 = vrcp.pop %v1221
    %v1223 = vmul.f32 %v1221, %v1222
    %v1224 = vsub.f32 1.0, %v1223
    %v1225 = vmul.f32 %v1222, %v1224
    %v1226 = vadd.f32 %v1222, %v1225
    %vm1227 = vweird.f32 %v1221
    %vm1228 = vweird.f32 %v1222
    %vm1229 = vmor %vm1227, %vm1228
    %v1230 = vsel %vm1229, %v1222, %v1226
    %v1231 = vand.u32 2147483647, %v1221
    %vm1232 = vcmp.eq.f32.partialorder %v1231, 8.507059e+37
    %v1233 = vand.u32 %v1221, 2147483648
    %v1234 = vor.u32 1.1754944e-38, %v1233
    %v1235 = vsel %vm1232, %v1234, %v1230
    %v1236 = vmul.f32 1.0, %v1235
    %v1237 = vsel %vm45, %v1217, %v1236
    %v1238 = vmul.f32 %v1237, %v1181
    %1240 = vrot.lane.b32.xlu0 %v1237, 64
    %v1241 = vpop.permute.xlu0 %1240
    %v1243 = vmul.f32 %v1237, %v1241
    %1245 = vrot.lane.b32.xlu0 %v1243, 32
    %v1246 = vpop.permute.xlu0 %1245
    %v1248 = vadd.f32 %v1238, %v1246
    %v1249 = vtanh.pop %v1248
    %1251 = vrot.lane.b32.xlu0 %v1249, 64
    %v1252 = vpop.permute.xlu0 %1251
    %v1254 = vmul.f32 %v1237, %v1252
    %1256 = vrot.lane.b32.xlu0 %v1254, 32
    %v1257 = vpop.permute.xlu0 %1256
    %1259 = vst.msk [vmem:[%s620] sm:$0xff] %vm62, %v1257
    %v1260 = vld [vmem:[%s622] sm:$0xff]
    %v1261 = vsel %vm62, %v1257, 0
    %1263 = vmatpush.msra.mxu0 0.0
    %1264 = vmatpush.msra.mxu0 0.0
    %1265 = vmatpush.msra.mxu0 0.0
    %1266 = vmatpush.msra.mxu0 0.0
    %1267 = vmatpush.msra.mxu0 0.0
    %1268 = vmatpush.msra.mxu0 0.0
    %1269 = vmatpush.msra.mxu0 0.0
    %1270 = vmatpush.msra.mxu0 0.0
    %1271 = vmatpush.msra.mxu0 0.0
    %1272 = vmatpush.msra.mxu0 0.0
    %1273 = vmatpush.msra.mxu0 0.0
    %1274 = vmatpush.msra.mxu0 0.0
    %1275 = vmatpush.msra.mxu0 %v792
    %1276 = vmatpush.msra.mxu0 %v791
    %1277 = vmatpush.msra.mxu0 %v790
    %1278 = vmatpush.msra.mxu0 %v789
    %1279 = vmatmul.f32.gmra.mxu0 %v1261
    %v1280 = vpop.f32.mrf.mxu0
    %v1281 = vadd.f32 0.0, %v1280
    %1282 = vdwg.mxu0
    %v1283 = vadd.f32 %v1260, %v1281
    %v1284 = vtanh.pop %v1283
    %v1285 = vxor.u32 %v1283, 2147483648
    %v1286 = vmul.f32 %v1285, 1.442695
    %v1287 = vpow.pop %v1286
    %v1288 = vadd.f32 %v1287, 1.0
    %v1289 = vrcp.pop %v1288
    %v1290 = vmul.f32 %v1288, %v1289
    %v1291 = vsub.f32 1.0, %v1290
    %v1292 = vmul.f32 %v1289, %v1291
    %v1293 = vadd.f32 %v1289, %v1292
    %vm1294 = vweird.f32 %v1288
    %vm1295 = vweird.f32 %v1289
    %vm1296 = vmor %vm1294, %vm1295
    %v1297 = vsel %vm1296, %v1289, %v1293
    %v1298 = vand.u32 2147483647, %v1288
    %vm1299 = vcmp.eq.f32.partialorder %v1298, 8.507059e+37
    %v1300 = vand.u32 %v1288, 2147483648
    %v1301 = vor.u32 1.1754944e-38, %v1300
    %v1302 = vsel %vm1299, %v1301, %v1297
    %v1303 = vmul.f32 1.0, %v1302
    %v1304 = vsel %vm45, %v1284, %v1303
    %v1305 = vmul.f32 %v1304, %v1248
    %1307 = vrot.lane.b32.xlu0 %v1304, 64
    %v1308 = vpop.permute.xlu0 %1307
    %v1310 = vmul.f32 %v1304, %v1308
    %1312 = vrot.lane.b32.xlu0 %v1310, 32
    %v1313 = vpop.permute.xlu0 %1312
    %v1315 = vadd.f32 %v1305, %v1313
    %v1316 = vtanh.pop %v1315
    %1318 = vrot.lane.b32.xlu0 %v1316, 64
    %v1319 = vpop.permute.xlu0 %1318
    %v1321 = vmul.f32 %v1304, %v1319
    %1323 = vrot.lane.b32.xlu0 %v1321, 32
    %v1324 = vpop.permute.xlu0 %1323
    %1326 = vst.msk [vmem:[%s689] sm:$0xff] %vm62, %v1324
    %s1327 = scalar_lea.vmem [#allocation6], 8
    %1328 = vst.msk [vmem:[%s1327] sm:$0xff] %vm62, %v1324
    %1330 = vrot.lane.b32.xlu0 %v1315, 96
    %v1331 = vpop.permute.xlu0 %1330
    %s1333 = scalar_lea.vmem [#allocation7], 8
    %1334 = vst.msk [vmem:[%s1333] sm:$0xff] %vm62, %v1331
    // Predicated region
    $region26: #{tpu_custom_call.1} parent=1 // pred_check
      _
    $region27: #{tpu_custom_call.1} parent=1 // pred_check_branch
      %1336 = sbr.rel (0) target = $region29
    $region28: #{tpu_custom_call.1} parent=1 // pred_region
      _
    $region29: #{tpu_custom_call.1} parent=1 // pred_fallthru
      _
    // Predicated region
    $region30: #{tpu_custom_call.1} parent=1 // pred_check
      _
    $region31: #{tpu_custom_call.1} parent=1 // pred_check_branch
      %1338 = sbr.rel (0) target = $region33
    $region32: #{tpu_custom_call.1} parent=1 // pred_region
      %1340 = vsyncadd [#allocation5], 0
      %s1341 = sshll.u32 [#allocation6], 4
      %s1342 = int_to_ptr.vmem [resolvable:$true] %s1341
      %s1343 = sshll.u32 %s6, 4
      %s1344 = int_to_ptr.hbm [resolvable:$true] %s1343
      %1349 = dma.vmem_to_hbm [thread:$0]  %s1342, 256, %s1344, [#allocation5], 128, 128, 8
    $region33: #{tpu_custom_call.1} parent=1 // pred_fallthru
      _
    // Predicated region
    $region34: #{tpu_custom_call.1} parent=1 // pred_check
      _
    $region35: #{tpu_custom_call.1} parent=1 // pred_check_branch
      %1351 = sbr.rel (0) target = $region37
    $region36: #{tpu_custom_call.1} parent=1 // pred_region
      %1353 = vsyncadd [#allocation8], 0
      %s1354 = sshll.u32 [#allocation7], 4
      %s1355 = int_to_ptr.vmem [resolvable:$true] %s1354
      %s1356 = sshll.u32 %s7, 4
      %s1357 = int_to_ptr.hbm [resolvable:$true] %s1356
      %1362 = dma.vmem_to_hbm [thread:$0]  %s1355, 256, %s1357, [#allocation8], 128, 128, 8
    $region37: #{tpu_custom_call.1} parent=1 // pred_fallthru
      _
    // Predicated region
    $region38: #{tpu_custom_call.1} parent=1 // pred_check
      _
    $region39: #{tpu_custom_call.1} parent=1 // pred_check_branch
      %1364 = sbr.rel (0) target = $region41
    $region40: #{tpu_custom_call.1} parent=1 // pred_region
      _
    $region41: #{tpu_custom_call.1} parent=1 // pred_fallthru
      _
    // Predicated region
    $region42: #{tpu_custom_call.1} parent=1 // pred_check
      _
    $region43: #{tpu_custom_call.1} parent=1 // pred_check_branch
      %1366 = sbr.rel (0) target = $region45
    $region44: #{tpu_custom_call.1} parent=1 // pred_region
      %1368 = dma.done [#allocation5], 256
    $region45: #{tpu_custom_call.1} parent=1 // pred_fallthru
      _
    // Predicated region
    $region46: #{tpu_custom_call.1} parent=1 // pred_check
      _
    $region47: #{tpu_custom_call.1} parent=1 // pred_check_branch
      %1370 = sbr.rel (0) target = $region49
    $region48: #{tpu_custom_call.1} parent=1 // pred_region
      %1372 = dma.done [#allocation8], 256
    $region49: #{tpu_custom_call.1} parent=1 // pred_fallthru
      _
    %1373 = vsyncpa [#allocation4], 1
    %1374 = vsyncpa [#allocation5], 1
    %1375 = vsyncpa [#allocation8], 1

</llo_original>
